<compile_context>
chip_gen: v7x
topology: tpu7x:2x2x1
jax: 0.10.0
libtpu: 0.0.40
codegen_flags: <defaults>
</compile_context>

<pallas_src>
import functools

import jax
import jax.numpy as jnp
from jax.experimental import pallas as pl
from jax.experimental.pallas import tpu as pltpu


def _round_up(x, m):
    return (x + m - 1) // m * m


def _tpu_generation():
    try:
        kind = jax.devices()[0].device_kind.lower()
    except Exception:
        return "unknown"
    if "v5" in kind:
        return "v5"
    if "v6" in kind:
        return "v6"
    if "7" in kind:
        return "v7"
    return "unknown"


def _gen_config():
    """Returns (epilogue compute dtype, vmem_limit_bytes, max patch-tile rows)."""
    gen = _tpu_generation()
    if gen == "v5":    # 128 MiB VMEM, no bf16 VPU, MXU-bound -> keep f32 epilogue.
        return jnp.float32, 96 * 1024 * 1024, 1024
    if gen == "v6":    # 128 MiB VMEM, bf16 VPU -> bf16 epilogue, large tiles.
        return jnp.bfloat16, 96 * 1024 * 1024, 1024
    if gen == "v7":    # 64 MiB VMEM, bf16 VPU, 2 TensorCores.
        return jnp.bfloat16, 44 * 1024 * 1024, 512
    return jnp.float32, 48 * 1024 * 1024, 256


# ----------------------------- Pallas kernel --------------------------------
def _encoder_kernel(patches_ref, w1_ref, b1_ref, w2_ref, b2_ref, ones_ref,
                    out_ref, acc_ref, *, n_pad_p, inv_p, compute_dtype):
    # patches_ref: [TB, TP, D] bf16   w1_ref: [D, Hp] bf16   b1_ref: [1, Hp] cdt
    # w2_ref:      [Hp, Ep]  bf16     b2_ref: [1, Ep] f32    ones_ref: [TB, TB*TP] cdt
    # out_ref:     [TB, Ep]  f32      acc_ref: [TB, Hp] f32  (pooled running sum)
    p_idx = pl.program_id(1)

    @pl.when(p_idx == 0)
    def _init():
        acc_ref[...] = jnp.zeros_like(acc_ref)

    tb, tp, d = patches_ref.shape

    # Patch embedding: one large 2D bf16 MXU matmul; result emitted directly in
    # the epilogue compute dtype (bf16 on v6e/v7x) so bias+GELU stay off the
    # f32 VALU path.  MXU still accumulates in f32 internally.
    x2d = patches_ref[...].reshape(tb * tp, d)
    h = jnp.dot(x2d, w1_ref[...], preferred_element_type=compute_dtype)
    h = h + b1_ref[...]                      # [1, Hp] broadcast, compute dtype
    g = jax.nn.gelu(h, approximate=True)     # [TB*TP, Hp], compute dtype

    # Pooled running sum over the patch axis via the MXU: block-diagonal ones
    # [TB, TB*TP] @ g -> [TB, Hp], accumulated in f32 (stays f32 across tiles).
    acc_ref[...] += jnp.dot(ones_ref[...], g, preferred_element_type=jnp.float32)

    @pl.when(p_idx == pl.num_programs(1) - 1)
    def _finalize():
        pooled = acc_ref[...]
        if n_pad_p:
            # Zero-padded patch rows each contribute exactly gelu(b1); remove
            # them once here instead of masking every grid step.
            corr = jax.nn.gelu(b1_ref[...], approximate=True).astype(jnp.float32)
            pooled = pooled - n_pad_p * corr
        pooled = pooled * inv_p                                     # mean over real P
        z = jnp.dot(pooled.astype(w2_ref.dtype), w2_ref[...],
                    preferred_element_type=jnp.float32)
        out_ref[...] = (z + b2_ref[...]).astype(out_ref.dtype)


# ------------------------------ wrapper --------------------------------------
def base_patch_encoder_forward(x, params, *, patch, tile_b=8):
    """x: [B, C, H, W] (NCHW, like the PyTorch module). Returns z: [B, embed]."""
    w1, b1, w2, b2 = params
    B, C, H, W = x.shape
    assert H % patch == 0 and W % patch == 0
    ph, pw = H // patch, W // patch
    P = ph * pw
    D = C * patch * patch
    hidden = w1.shape[1]
    embed = w2.shape[1]

    compute_dtype, vmem_limit, tile_p_cap = _gen_config()
    csize = jnp.dtype(compute_dtype).itemsize

    # ---- padded sizes (lane dim -> x128, sublane -> x8) ----
    tile_b = max(8, tile_b)        # keep 8: >=2 parallel batch tiles whenever B > 8
    B_pad = _round_up(B, tile_b)
    D_pad = _round_up(D, 128)
    H_pad = _round_up(hidden, 128)
    E_pad = _round_up(embed, 128)

    # ---- VMEM-aware cap on tile_p, then split P evenly (P_pad ~= P) ----
    weight_bytes = (D_pad * H_pad + H_pad * E_pad) * 2 + (H_pad + E_pad) * 4
    per_prow = 2 * (tile_b * D_pad * 2) + 3 * (tile_b * H_pad * csize)
    avail = int(vmem_limit * 0.7) - weight_bytes
    if avail > per_prow * 8:
        tile_p_cap = min(tile_p_cap, (avail // per_prow) // 8 * 8)
    else:
        tile_p_cap = 8
    tile_p_cap = max(8, tile_p_cap)
    n_p_tiles = max(1, -(-P // tile_p_cap))                       # ceil(P / cap)
    tile_p = min(_round_up(-(-P // n_p_tiles), 8), _round_up(P, 8))
    P_pad = _round_up(P, tile_p)

    # ---- patchify in bf16 (skip the pad entirely when already aligned) ----
    xb = x.astype(jnp.bfloat16)
    patches = xb.reshape(B, C, ph, patch, pw, patch)
    patches = patches.transpose(0, 2, 4, 1, 3, 5).reshape(B, P, D)      # [B, P, D]
    pad = ((0, B_pad - B), (0, P_pad - P), (0, D_pad - D))
    if any(p[1] for p in pad):
        patches = jnp.pad(patches, pad)
    # TODO(synk): for HBM-bound configs, fold patch extraction into the kernel
    # (NHWC input + index_map) to avoid materializing this [B, P, D] copy.

    # ---- weights: zero-pad to lane-aligned shapes, bf16 MXU operands ----
    w1p = jnp.pad(w1, ((0, D_pad - D), (0, H_pad - hidden))).astype(jnp.bfloat16)
    b1p = jnp.pad(b1, ((0, H_pad - hidden),)).reshape(1, H_pad).astype(compute_dtype)
    w2p = jnp.pad(w2, ((0, H_pad - hidden), (0, E_pad - embed))).astype(jnp.bfloat16)
    b2p = jnp.pad(b2, ((0, E_pad - embed),)).reshape(1, E_pad).astype(jnp.float32)

    # Block-diagonal ones: pools each batch row's tile_p patch rows on the MXU.
    row = jax.lax.broadcasted_iota(jnp.int32, (tile_b, tile_b * tile_p), 0)
    col = jax.lax.broadcasted_iota(jnp.int32, (tile_b, tile_b * tile_p), 1)
    pool_ones = (col // tile_p == row).astype(compute_dtype)

    grid = (B_pad // tile_b, P_pad // tile_p)

    flops = (2 * B_pad * P_pad * D_pad * H_pad            # patch embedding
             + 2 * B_pad * P_pad * tile_b * H_pad         # MXU pooling
             + 2 * B_pad * H_pad * E_pad)                 # head
    bytes_accessed = (patches.size * 2 + w1p.size * 2 + w2p.size * 2
                      + b1p.size * csize + b2p.size * 4
                      + pool_ones.size * csize + B_pad * E_pad * 4)
    cost = pl.CostEstimate(flops=int(flops),
                           transcendentals=int(B_pad * P_pad * H_pad),
                           bytes_accessed=int(bytes_accessed))

    kernel = functools.partial(_encoder_kernel,
                               n_pad_p=int(P_pad - P),
                               inv_p=float(1.0 / P),
                               compute_dtype=compute_dtype)

    def _make_call(single_buffer_weights):
        const = lambda b, p: (0, 0)
        kw = {}
        if single_buffer_weights and hasattr(pl, "Buffered"):
            kw = dict(pipeline_mode=pl.Buffered(buffer_count=1))
        in_specs = [
            pl.BlockSpec((tile_b, tile_p, D_pad), lambda b, p: (b, p, 0)),  # patches
            pl.BlockSpec((D_pad, H_pad), const, **kw),                      # w1 (resident)
            pl.BlockSpec((1, H_pad), const, **kw),                          # b1 (resident)
            pl.BlockSpec((H_pad, E_pad), const, **kw),                      # w2 (resident)
            pl.BlockSpec((1, E_pad), const, **kw),                          # b2 (resident)
            pl.BlockSpec((tile_b, tile_b * tile_p), const, **kw),           # pooling ones
        ]
        return pl.pallas_call(
            kernel,
            out_shape=jax.ShapeDtypeStruct((B_pad, E_pad), jnp.float32),
            grid_spec=pltpu.PrefetchScalarGridSpec(
                num_scalar_prefetch=0,
                grid=grid,
                in_specs=in_specs,
                out_specs=pl.BlockSpec((tile_b, E_pad), lambda b, p: (b, 0)),
                scratch_shapes=[pltpu.VMEM((tile_b, H_pad), jnp.float32)],
            ),
            compiler_params=pltpu.CompilerParams(
                dimension_semantics=("parallel", "arbitrary"),   # batch sharded across TCs
                vmem_limit_bytes=int(vmem_limit),
            ),
            cost_estimate=cost,
        )

    args = (patches, w1p, b1p, w2p, b2p, pool_ones)
    try:
        out = _make_call(True)(*args)
    except Exception:
        # pipeline_mode=pl.Buffered(1) not supported on this jax version — fall
        # back to default (double-buffered) resident weight specs.
        out = _make_call(False)(*args)

    return out[:B, :embed]


# ------------------------------ reference / params ---------------------------
def _reference_forward(x, params, *, patch, compute_dtype=jnp.float32):
    """Pure-JAX reference mirroring the kernel's dtype choices."""
    w1, b1, w2, b2 = params
    B, C, H, W = x.shape
    ph, pw = H // patch, W // patch
    P, D = ph * pw, C * patch * patch
    patches = x.astype(jnp.bfloat16).reshape(B, C, ph, patch, pw, patch)
    patches = patches.transpose(0, 2, 4, 1, 3, 5).reshape(B, P, D)
    h = jnp.einsum("bpd,dh->bph", patches, w1.astype(jnp.bfloat16),
                   preferred_element_type=compute_dtype)
    h = h + b1.astype(compute_dtype)
    g = jax.nn.gelu(h, approximate=True)
    pooled = g.astype(jnp.float32).mean(axis=1)
    z = jnp.dot(pooled.astype(jnp.bfloat16), w2.astype(jnp.bfloat16),
                preferred_element_type=jnp.float32) + b2
    return z


def init_params(key, *, in_chans, patch, hidden, embed):
    d = in_chans * patch * patch
    k1, k2, k3, k4 = jax.random.split(key, 4)
    w1 = jax.random.normal(k1, (d, hidden), jnp.float32) * (1.0 / jnp.sqrt(d))
    b1 = jax.random.normal(k2, (hidden,), jnp.float32) * 0.01
    w2 = jax.random.normal(k3, (hidden, embed), jnp.float32) * (1.0 / jnp.sqrt(hidden))
    b2 = jax.random.normal(k4, (embed,), jnp.float32) * 0.01
    return w1, b1, w2, b2


if __name__ == "__main__":
    key = jax.random.PRNGKey(0)
    B, C, H, W = 2, 4, 16, 16
    PATCH, HIDDEN, EMBED = 8, 32, 32

    kx, kp = jax.random.split(key)
    x = jax.random.normal(kx, (B, C, H, W), jnp.float32)
    params = init_params(kp, in_chans=C, patch=PATCH, hidden=HIDDEN, embed=EMBED)

    z = base_patch_encoder_forward(x, params, patch=PATCH)
    jax.block_until_ready(z)

    compute_dtype, _, _ = _gen_config()
    z_ref = _reference_forward(x, params, patch=PATCH, compute_dtype=compute_dtype)
    assert z.shape == (B, EMBED)
    assert jnp.allclose(z, z_ref, rtol=5e-2, atol=5e-2), \
        float(jnp.max(jnp.abs(z - z_ref)))
    print("KERNEL_OK")
</pallas_src>

<mosaic_0001>
module attributes {stable_mosaic.version = 11 : i64} {
  func.func @_encoder_kernel(%arg0: i32, %arg1: i32, %arg2: memref<8x8x256xbf16, #tpu.memory_space<vmem>>, %arg3: memref<256x128xbf16, #tpu.memory_space<vmem>>, %arg4: memref<1x128xf32, #tpu.memory_space<vmem>>, %arg5: memref<128x128xbf16, #tpu.memory_space<vmem>>, %arg6: memref<1x128xf32, #tpu.memory_space<vmem>>, %arg7: memref<8x64xf32, #tpu.memory_space<vmem>>, %arg8: memref<8x128xf32, #tpu.memory_space<vmem>>, %arg9: memref<8x128xf32, #tpu.memory_space<vmem>>) attributes {dimension_semantics = [#tpu.dimension_semantics<parallel>, #tpu.dimension_semantics<arbitrary>], iteration_bounds = array<i64: 1, 1>, scalar_prefetch = 0 : i64, scratch_operands = 1 : i64, tpu.core_type = #tpu.core_type<tc>, window_params = [{transform_indices = @transform_0, window_bounds = array<i64: 8, 8, 256>}, {pipeline_mode = #tpu.pipeline_mode<synchronous>, transform_indices = @transform_1, window_bounds = array<i64: 256, 128>}, {pipeline_mode = #tpu.pipeline_mode<synchronous>, transform_indices = @transform_2, window_bounds = array<i64: 1, 128>}, {pipeline_mode = #tpu.pipeline_mode<synchronous>, transform_indices = @transform_3, window_bounds = array<i64: 128, 128>}, {pipeline_mode = #tpu.pipeline_mode<synchronous>, transform_indices = @transform_4, window_bounds = array<i64: 1, 128>}, {pipeline_mode = #tpu.pipeline_mode<synchronous>, transform_indices = @transform_5, window_bounds = array<i64: 8, 64>}, {transform_indices = @transform_6, window_bounds = array<i64: 8, 128>}]} {
    %c0_i32 = arith.constant 0 : i32
    %0 = arith.cmpi eq, %arg1, %c0_i32 : i32
    %1 = arith.extui %0 : i1 to i32
    %c0_i32_0 = arith.constant 0 : i32
    %2 = arith.cmpi ne, %1, %c0_i32_0 : i32
    scf.if %2 {
      %cst_20 = arith.constant 0.000000e+00 : f32
      %31 = vector.broadcast %cst_20 : f32 to vector<8x128xf32>
      %c0_21 = arith.constant 0 : index
      %c0_22 = arith.constant 0 : index
      %32 = vector.load %arg9[%c0_21, %c0_22] : memref<8x128xf32, #tpu.memory_space<vmem>>, vector<8x128xf32>
      tpu.vector_store %arg9[%c0_21, %c0_22], %31 {strides = array<i32>} : memref<8x128xf32, #tpu.memory_space<vmem>>, vector<8x128xf32>,
    } else {
    }
    %c0 = arith.constant 0 : index
    %c0_1 = arith.constant 0 : index
    %c0_2 = arith.constant 0 : index
    %3 = vector.load %arg2[%c0, %c0_1, %c0_2] : memref<8x8x256xbf16, #tpu.memory_space<vmem>>, vector<8x8x256xbf16>
    %4 = vector.shape_cast %3 : vector<8x8x256xbf16> to vector<64x256xbf16>
    %c0_3 = arith.constant 0 : index
    %c0_4 = arith.constant 0 : index
    %5 = vector.load %arg3[%c0_3, %c0_4] : memref<256x128xbf16, #tpu.memory_space<vmem>>, vector<256x128xbf16>
    %cst = arith.constant dense<0.000000e+00> : vector<64x128xf32>
    %6 = tpu.matmul %4, %5, %cst {dimension_numbers = #tpu.dot_dimension_numbers<[1], [0], [0], [1], [0, 0, 1, 1], [], []>} : vector<64x256xbf16>, vector<256x128xbf16>, vector<64x128xf32> -> vector<64x128xf32>
    %c0_5 = arith.constant 0 : index
    %c0_6 = arith.constant 0 : index
    %7 = vector.load %arg4[%c0_5, %c0_6] : memref<1x128xf32, #tpu.memory_space<vmem>>, vector<1x128xf32>
    %8 = vector.broadcast %7 : vector<1x128xf32> to vector<64x128xf32>
    %9 = arith.addf %6, %8 : vector<64x128xf32>
    %10 = arith.mulf %9, %9 : vector<64x128xf32>
    %11 = arith.mulf %9, %10 : vector<64x128xf32>
    %cst_7 = arith.constant 4.471500e-02 : f32
    %12 = vector.broadcast %cst_7 : f32 to vector<64x128xf32>
    %13 = arith.mulf %12, %11 : vector<64x128xf32>
    %14 = arith.addf %9, %13 : vector<64x128xf32>
    %cst_8 = arith.constant 0.797884583 : f32
    %15 = vector.broadcast %cst_8 : f32 to vector<64x128xf32>
    %16 = arith.mulf %15, %14 : vector<64x128xf32>
    %17 = math.tanh %16 : vector<64x128xf32>
    %cst_9 = arith.constant 1.000000e+00 : f32
    %18 = vector.broadcast %cst_9 : f32 to vector<64x128xf32>
    %19 = arith.addf %18, %17 : vector<64x128xf32>
    %cst_10 = arith.constant 5.000000e-01 : f32
    %20 = vector.broadcast %cst_10 : f32 to vector<64x128xf32>
    %21 = arith.mulf %20, %19 : vector<64x128xf32>
    %22 = arith.mulf %9, %21 : vector<64x128xf32>
    %c0_11 = arith.constant 0 : index
    %c0_12 = arith.constant 0 : index
    %23 = vector.load %arg9[%c0_11, %c0_12] : memref<8x128xf32, #tpu.memory_space<vmem>>, vector<8x128xf32>
    %c0_13 = arith.constant 0 : index
    %c0_14 = arith.constant 0 : index
    %24 = vector.load %arg7[%c0_13, %c0_14] : memref<8x64xf32, #tpu.memory_space<vmem>>, vector<8x64xf32>
    %cst_15 = arith.constant dense<0.000000e+00> : vector<8x128xf32>
    %25 = tpu.matmul %24, %22, %cst_15 {dimension_numbers = #tpu.dot_dimension_numbers<[1], [0], [0], [1], [0, 0, 1, 1], [], []>} : vector<8x64xf32>, vector<64x128xf32>, vector<8x128xf32> -> vector<8x128xf32>
    %26 = arith.addf %23, %25 : vector<8x128xf32>
    %c0_16 = arith.constant 0 : index
    %c0_17 = arith.constant 0 : index
    %27 = vector.load %arg9[%c0_16, %c0_17] : memref<8x128xf32, #tpu.memory_space<vmem>>, vector<8x128xf32>
    tpu.vector_store %arg9[%c0_16, %c0_17], %26 {strides = array<i32>} : memref<8x128xf32, #tpu.memory_space<vmem>>, vector<8x128xf32>,
    %c0_i32_18 = arith.constant 0 : i32
    %28 = arith.cmpi eq, %arg1, %c0_i32_18 : i32
    %29 = arith.extui %28 : i1 to i32
    %c0_i32_19 = arith.constant 0 : i32
    %30 = arith.cmpi ne, %29, %c0_i32_19 : i32
    scf.if %30 {
      %c0_20 = arith.constant 0 : index
      %c0_21 = arith.constant 0 : index
      %31 = vector.load %arg9[%c0_20, %c0_21] : memref<8x128xf32, #tpu.memory_space<vmem>>, vector<8x128xf32>
      %c0_22 = arith.constant 0 : index
      %c0_23 = arith.constant 0 : index
      %32 = vector.load %arg4[%c0_22, %c0_23] : memref<1x128xf32, #tpu.memory_space<vmem>>, vector<1x128xf32>
      %33 = arith.mulf %32, %32 : vector<1x128xf32>
      %34 = arith.mulf %32, %33 : vector<1x128xf32>
      %cst_24 = arith.constant 4.471500e-02 : f32
      %35 = vector.broadcast %cst_24 : f32 to vector<1x128xf32>
      %36 = arith.mulf %35, %34 : vector<1x128xf32>
      %37 = arith.addf %32, %36 : vector<1x128xf32>
      %cst_25 = arith.constant 0.797884583 : f32
      %38 = vector.broadcast %cst_25 : f32 to vector<1x128xf32>
      %39 = arith.mulf %38, %37 : vector<1x128xf32>
      %40 = math.tanh %39 : vector<1x128xf32>
      %cst_26 = arith.constant 1.000000e+00 : f32
      %41 = vector.broadcast %cst_26 : f32 to vector<1x128xf32>
      %42 = arith.addf %41, %40 : vector<1x128xf32>
      %cst_27 = arith.constant 5.000000e-01 : f32
      %43 = vector.broadcast %cst_27 : f32 to vector<1x128xf32>
      %44 = arith.mulf %43, %42 : vector<1x128xf32>
      %45 = arith.mulf %32, %44 : vector<1x128xf32>
      %cst_28 = arith.constant 4.000000e+00 : f32
      %46 = vector.broadcast %cst_28 : f32 to vector<1x128xf32>
      %47 = arith.mulf %46, %45 : vector<1x128xf32>
      %48 = vector.broadcast %47 : vector<1x128xf32> to vector<8x128xf32>
      %49 = arith.subf %31, %48 : vector<8x128xf32>
      %cst_29 = arith.constant 2.500000e-01 : f32
      %50 = vector.broadcast %cst_29 : f32 to vector<8x128xf32>
      %51 = arith.mulf %49, %50 : vector<8x128xf32>
      %52 = arith.truncf %51 : vector<8x128xf32> to vector<8x128xbf16>
      %c0_30 = arith.constant 0 : index
      %c0_31 = arith.constant 0 : index
      %53 = vector.load %arg5[%c0_30, %c0_31] : memref<128x128xbf16, #tpu.memory_space<vmem>>, vector<128x128xbf16>
      %cst_32 = arith.constant dense<0.000000e+00> : vector<8x128xf32>
      %54 = tpu.matmul %52, %53, %cst_32 {dimension_numbers = #tpu.dot_dimension_numbers<[1], [0], [0], [1], [0, 0, 1, 1], [], []>} : vector<8x128xbf16>, vector<128x128xbf16>, vector<8x128xf32> -> vector<8x128xf32>
      %c0_33 = arith.constant 0 : index
      %c0_34 = arith.constant 0 : index
      %55 = vector.load %arg6[%c0_33, %c0_34] : memref<1x128xf32, #tpu.memory_space<vmem>>, vector<1x128xf32>
      %56 = vector.broadcast %55 : vector<1x128xf32> to vector<8x128xf32>
      %57 = arith.addf %54, %56 : vector<8x128xf32>
      %c0_35 = arith.constant 0 : index
      %c0_36 = arith.constant 0 : index
      %58 = vector.load %arg8[%c0_35, %c0_36] : memref<8x128xf32, #tpu.memory_space<vmem>>, vector<8x128xf32>
      tpu.vector_store %arg8[%c0_35, %c0_36], %57 {strides = array<i32>} : memref<8x128xf32, #tpu.memory_space<vmem>>, vector<8x128xf32>,
    } else {
    }
    return
  }
  func.func @transform_0(%arg0: i32, %arg1: i32) -> (i32, i32, i32) {
    %c0_i32 = arith.constant 0 : i32
    %c0_i32_0 = arith.constant 0 : i32
    return %arg0, %arg1, %c0_i32 : i32, i32, i32
  }
  func.func @transform_1(%arg0: i32, %arg1: i32) -> (i32, i32) {
    %c0_i32 = arith.constant 0 : i32
    %c0_i32_0 = arith.constant 0 : i32
    %c0_i32_1 = arith.constant 0 : i32
    return %c0_i32, %c0_i32_0 : i32, i32
  }
  func.func @transform_2(%arg0: i32, %arg1: i32) -> (i32, i32) {
    %c0_i32 = arith.constant 0 : i32
    %c0_i32_0 = arith.constant 0 : i32
    %c0_i32_1 = arith.constant 0 : i32
    return %c0_i32, %c0_i32_0 : i32, i32
  }
  func.func @transform_3(%arg0: i32, %arg1: i32) -> (i32, i32) {
    %c0_i32 = arith.constant 0 : i32
    %c0_i32_0 = arith.constant 0 : i32
    %c0_i32_1 = arith.constant 0 : i32
    return %c0_i32, %c0_i32_0 : i32, i32
  }
  func.func @transform_4(%arg0: i32, %arg1: i32) -> (i32, i32) {
    %c0_i32 = arith.constant 0 : i32
    %c0_i32_0 = arith.constant 0 : i32
    %c0_i32_1 = arith.constant 0 : i32
    return %c0_i32, %c0_i32_0 : i32, i32
  }
  func.func @transform_5(%arg0: i32, %arg1: i32) -> (i32, i32) {
    %c0_i32 = arith.constant 0 : i32
    %c0_i32_0 = arith.constant 0 : i32
    %c0_i32_1 = arith.constant 0 : i32
    return %c0_i32, %c0_i32_0 : i32, i32
  }
  func.func @transform_6(%arg0: i32, %arg1: i32) -> (i32, i32) {
    %c0_i32 = arith.constant 0 : i32
    %c0_i32_0 = arith.constant 0 : i32
    return %arg0, %c0_i32 : i32, i32
  }
}

module attributes {stable_mosaic.version = 11 : i64} {
  func.func @_encoder_kernel(%arg0: i32, %arg1: i32, %arg2: memref<8x8x256xbf16, #tpu.memory_space<vmem>>, %arg3: memref<256x128xbf16, #tpu.memory_space<vmem>>, %arg4: memref<1x128xf32, #tpu.memory_space<vmem>>, %arg5: memref<128x128xbf16, #tpu.memory_space<vmem>>, %arg6: memref<1x128xf32, #tpu.memory_space<vmem>>, %arg7: memref<8x64xf32, #tpu.memory_space<vmem>>, %arg8: memref<8x128xf32, #tpu.memory_space<vmem>>, %arg9: memref<8x128xf32, #tpu.memory_space<vmem>>) attributes {dimension_semantics = [#tpu.dimension_semantics<parallel>, #tpu.dimension_semantics<arbitrary>], iteration_bounds = array<i64: 1, 1>, scalar_prefetch = 0 : i64, scratch_operands = 1 : i64, tpu.core_type = #tpu.core_type<tc>, window_params = [{transform_indices = @transform_0, window_bounds = array<i64: 8, 8, 256>}, {pipeline_mode = #tpu.pipeline_mode<synchronous>, transform_indices = @transform_1, window_bounds = array<i64: 256, 128>}, {pipeline_mode = #tpu.pipeline_mode<synchronous>, transform_indices = @transform_2, window_bounds = array<i64: 1, 128>}, {pipeline_mode = #tpu.pipeline_mode<synchronous>, transform_indices = @transform_3, window_bounds = array<i64: 128, 128>}, {pipeline_mode = #tpu.pipeline_mode<synchronous>, transform_indices = @transform_4, window_bounds = array<i64: 1, 128>}, {pipeline_mode = #tpu.pipeline_mode<synchronous>, transform_indices = @transform_5, window_bounds = array<i64: 8, 64>}, {transform_indices = @transform_6, window_bounds = array<i64: 8, 128>}]} {
    %c0_i32 = arith.constant 0 : i32
    %0 = arith.cmpi eq, %arg1, %c0_i32 : i32
    %1 = arith.extui %0 : i1 to i32
    %c0_i32_0 = arith.constant 0 : i32
    %2 = arith.cmpi ne, %1, %c0_i32_0 : i32
    scf.if %2 {
      %cst_20 = arith.constant 0.000000e+00 : f32
      %31 = vector.broadcast %cst_20 : f32 to vector<8x128xf32>
      %c0_21 = arith.constant 0 : index
      %c0_22 = arith.constant 0 : index
      %32 = vector.load %arg9[%c0_21, %c0_22] : memref<8x128xf32, #tpu.memory_space<vmem>>, vector<8x128xf32>
      tpu.vector_store %arg9[%c0_21, %c0_22], %31 {strides = array<i32>} : memref<8x128xf32, #tpu.memory_space<vmem>>, vector<8x128xf32>,
    } else {
    }
    %c0 = arith.constant 0 : index
    %c0_1 = arith.constant 0 : index
    %c0_2 = arith.constant 0 : index
    %3 = vector.load %arg2[%c0, %c0_1, %c0_2] : memref<8x8x256xbf16, #tpu.memory_space<vmem>>, vector<8x8x256xbf16>
    %4 = vector.shape_cast %3 : vector<8x8x256xbf16> to vector<64x256xbf16>
    %c0_3 = arith.constant 0 : index
    %c0_4 = arith.constant 0 : index
    %5 = vector.load %arg3[%c0_3, %c0_4] : memref<256x128xbf16, #tpu.memory_space<vmem>>, vector<256x128xbf16>
    %cst = arith.constant dense<0.000000e+00> : vector<64x128xf32>
    %6 = tpu.matmul %4, %5, %cst {dimension_numbers = #tpu.dot_dimension_numbers<[1], [0], [0], [1], [0, 0, 1, 1], [], []>} : vector<64x256xbf16>, vector<256x128xbf16>, vector<64x128xf32> -> vector<64x128xf32>
    %c0_5 = arith.constant 0 : index
    %c0_6 = arith.constant 0 : index
    %7 = vector.load %arg4[%c0_5, %c0_6] : memref<1x128xf32, #tpu.memory_space<vmem>>, vector<1x128xf32>
    %8 = vector.broadcast %7 : vector<1x128xf32> to vector<64x128xf32>
    %9 = arith.addf %6, %8 : vector<64x128xf32>
    %10 = arith.mulf %9, %9 : vector<64x128xf32>
    %11 = arith.mulf %9, %10 : vector<64x128xf32>
    %cst_7 = arith.constant 4.471500e-02 : f32
    %12 = vector.broadcast %cst_7 : f32 to vector<64x128xf32>
    %13 = arith.mulf %12, %11 : vector<64x128xf32>
    %14 = arith.addf %9, %13 : vector<64x128xf32>
    %cst_8 = arith.constant 0.797884583 : f32
    %15 = vector.broadcast %cst_8 : f32 to vector<64x128xf32>
    %16 = arith.mulf %15, %14 : vector<64x128xf32>
    %17 = math.tanh %16 : vector<64x128xf32>
    %cst_9 = arith.constant 1.000000e+00 : f32
    %18 = vector.broadcast %cst_9 : f32 to vector<64x128xf32>
    %19 = arith.addf %18, %17 : vector<64x128xf32>
    %cst_10 = arith.constant 5.000000e-01 : f32
    %20 = vector.broadcast %cst_10 : f32 to vector<64x128xf32>
    %21 = arith.mulf %20, %19 : vector<64x128xf32>
    %22 = arith.mulf %9, %21 : vector<64x128xf32>
    %c0_11 = arith.constant 0 : index
    %c0_12 = arith.constant 0 : index
    %23 = vector.load %arg9[%c0_11, %c0_12] : memref<8x128xf32, #tpu.memory_space<vmem>>, vector<8x128xf32>
    %c0_13 = arith.constant 0 : index
    %c0_14 = arith.constant 0 : index
    %24 = vector.load %arg7[%c0_13, %c0_14] : memref<8x64xf32, #tpu.memory_space<vmem>>, vector<8x64xf32>
    %cst_15 = arith.constant dense<0.000000e+00> : vector<8x128xf32>
    %25 = tpu.matmul %24, %22, %cst_15 {dimension_numbers = #tpu.dot_dimension_numbers<[1], [0], [0], [1], [0, 0, 1, 1], [], []>} : vector<8x64xf32>, vector<64x128xf32>, vector<8x128xf32> -> vector<8x128xf32>
    %26 = arith.addf %23, %25 : vector<8x128xf32>
    %c0_16 = arith.constant 0 : index
    %c0_17 = arith.constant 0 : index
    %27 = vector.load %arg9[%c0_16, %c0_17] : memref<8x128xf32, #tpu.memory_space<vmem>>, vector<8x128xf32>
    tpu.vector_store %arg9[%c0_16, %c0_17], %26 {strides = array<i32>} : memref<8x128xf32, #tpu.memory_space<vmem>>, vector<8x128xf32>,
    %c0_i32_18 = arith.constant 0 : i32
    %28 = arith.cmpi eq, %arg1, %c0_i32_18 : i32
    %29 = arith.extui %28 : i1 to i32
    %c0_i32_19 = arith.constant 0 : i32
    %30 = arith.cmpi ne, %29, %c0_i32_19 : i32
    scf.if %30 {
      %c0_20 = arith.constant 0 : index
      %c0_21 = arith.constant 0 : index
      %31 = vector.load %arg9[%c0_20, %c0_21] : memref<8x128xf32, #tpu.memory_space<vmem>>, vector<8x128xf32>
      %c0_22 = arith.constant 0 : index
      %c0_23 = arith.constant 0 : index
      %32 = vector.load %arg4[%c0_22, %c0_23] : memref<1x128xf32, #tpu.memory_space<vmem>>, vector<1x128xf32>
      %33 = arith.mulf %32, %32 : vector<1x128xf32>
      %34 = arith.mulf %32, %33 : vector<1x128xf32>
      %cst_24 = arith.constant 4.471500e-02 : f32
      %35 = vector.broadcast %cst_24 : f32 to vector<1x128xf32>
      %36 = arith.mulf %35, %34 : vector<1x128xf32>
      %37 = arith.addf %32, %36 : vector<1x128xf32>
      %cst_25 = arith.constant 0.797884583 : f32
      %38 = vector.broadcast %cst_25 : f32 to vector<1x128xf32>
      %39 = arith.mulf %38, %37 : vector<1x128xf32>
      %40 = math.tanh %39 : vector<1x128xf32>
      %cst_26 = arith.constant 1.000000e+00 : f32
      %41 = vector.broadcast %cst_26 : f32 to vector<1x128xf32>
      %42 = arith.addf %41, %40 : vector<1x128xf32>
      %cst_27 = arith.constant 5.000000e-01 : f32
      %43 = vector.broadcast %cst_27 : f32 to vector<1x128xf32>
      %44 = arith.mulf %43, %42 : vector<1x128xf32>
      %45 = arith.mulf %32, %44 : vector<1x128xf32>
      %cst_28 = arith.constant 4.000000e+00 : f32
      %46 = vector.broadcast %cst_28 : f32 to vector<1x128xf32>
      %47 = arith.mulf %46, %45 : vector<1x128xf32>
      %48 = vector.broadcast %47 : vector<1x128xf32> to vector<8x128xf32>
      %49 = arith.subf %31, %48 : vector<8x128xf32>
      %cst_29 = arith.constant 2.500000e-01 : f32
      %50 = vector.broadcast %cst_29 : f32 to vector<8x128xf32>
      %51 = arith.mulf %49, %50 : vector<8x128xf32>
      %52 = arith.truncf %51 : vector<8x128xf32> to vector<8x128xbf16>
      %c0_30 = arith.constant 0 : index
      %c0_31 = arith.constant 0 : index
      %53 = vector.load %arg5[%c0_30, %c0_31] : memref<128x128xbf16, #tpu.memory_space<vmem>>, vector<128x128xbf16>
      %cst_32 = arith.constant dense<0.000000e+00> : vector<8x128xf32>
      %54 = tpu.matmul %52, %53, %cst_32 {dimension_numbers = #tpu.dot_dimension_numbers<[1], [0], [0], [1], [0, 0, 1, 1], [], []>} : vector<8x128xbf16>, vector<128x128xbf16>, vector<8x128xf32> -> vector<8x128xf32>
      %c0_33 = arith.constant 0 : index
      %c0_34 = arith.constant 0 : index
      %55 = vector.load %arg6[%c0_33, %c0_34] : memref<1x128xf32, #tpu.memory_space<vmem>>, vector<1x128xf32>
      %56 = vector.broadcast %55 : vector<1x128xf32> to vector<8x128xf32>
      %57 = arith.addf %54, %56 : vector<8x128xf32>
      %c0_35 = arith.constant 0 : index
      %c0_36 = arith.constant 0 : index
      %58 = vector.load %arg8[%c0_35, %c0_36] : memref<8x128xf32, #tpu.memory_space<vmem>>, vector<8x128xf32>
      tpu.vector_store %arg8[%c0_35, %c0_36], %57 {strides = array<i32>} : memref<8x128xf32, #tpu.memory_space<vmem>>, vector<8x128xf32>,
    } else {
    }
    return
  }
  func.func @transform_0(%arg0: i32, %arg1: i32) -> (i32, i32, i32) {
    %c0_i32 = arith.constant 0 : i32
    %c0_i32_0 = arith.constant 0 : i32
    return %arg0, %arg1, %c0_i32 : i32, i32, i32
  }
  func.func @transform_1(%arg0: i32, %arg1: i32) -> (i32, i32) {
    %c0_i32 = arith.constant 0 : i32
    %c0_i32_0 = arith.constant 0 : i32
    %c0_i32_1 = arith.constant 0 : i32
    return %c0_i32, %c0_i32_0 : i32, i32
  }
  func.func @transform_2(%arg0: i32, %arg1: i32) -> (i32, i32) {
    %c0_i32 = arith.constant 0 : i32
    %c0_i32_0 = arith.constant 0 : i32
    %c0_i32_1 = arith.constant 0 : i32
    return %c0_i32, %c0_i32_0 : i32, i32
  }
  func.func @transform_3(%arg0: i32, %arg1: i32) -> (i32, i32) {
    %c0_i32 = arith.constant 0 : i32
    %c0_i32_0 = arith.constant 0 : i32
    %c0_i32_1 = arith.constant 0 : i32
    return %c0_i32, %c0_i32_0 : i32, i32
  }
  func.func @transform_4(%arg0: i32, %arg1: i32) -> (i32, i32) {
    %c0_i32 = arith.constant 0 : i32
    %c0_i32_0 = arith.constant 0 : i32
    %c0_i32_1 = arith.constant 0 : i32
    return %c0_i32, %c0_i32_0 : i32, i32
  }
  func.func @transform_5(%arg0: i32, %arg1: i32) -> (i32, i32) {
    %c0_i32 = arith.constant 0 : i32
    %c0_i32_0 = arith.constant 0 : i32
    %c0_i32_1 = arith.constant 0 : i32
    return %c0_i32, %c0_i32_0 : i32, i32
  }
  func.func @transform_6(%arg0: i32, %arg1: i32) -> (i32, i32) {
    %c0_i32 = arith.constant 0 : i32
    %c0_i32_0 = arith.constant 0 : i32
    return %arg0, %c0_i32 : i32, i32
  }
}

</mosaic_0001>

<llo_original>
// kernel: tpu_custom_call.1
$region0: #{tpu_custom_call.1}
  #allocation0 [shape = 'u32[]', space=smem, size = 0x4, offset = 0x4, fixed_abs, tag = 'smem constant byte address 0x4 - core index']
  #allocation1 [shape = 'u32[144,128]{1,0:T(1,128)}', space=vmem, size = 0x12000, scoped, tag = 'internal scratch']
  #allocation2 [shape = 'f32[8,128]{1,0:T(8,128)}', space=vmem, size = 0x1000, scoped, tag = 'scratch operand']
  %s0 = inlined_call_operand.hbm [shape: bf16[8,8,256], index: 0, kind: input, shape index: {}]
  %s1 = inlined_call_operand.hbm [shape: bf16[256,128], index: 1, kind: input, shape index: {}]
  %s2 = inlined_call_operand.vmem [shape: f32[1,128], index: 2, kind: input, shape index: {}]
  %s3 = inlined_call_operand.hbm [shape: bf16[128,128], index: 3, kind: input, shape index: {}]
  %s4 = inlined_call_operand.vmem [shape: f32[1,128], index: 4, kind: input, shape index: {}]
  %s5 = inlined_call_operand.vmem [shape: f32[8,64], index: 5, kind: input, shape index: {}]
  %s6 = inlined_call_operand.hbm [shape: f32[8,128], index: 6, kind: output, shape index: {}]
  %s7 = sld [smem:[#allocation0]]
  $region54: #{tpu_custom_call.1} parent=0
    _
  %s9 = ssub.s32 1, %s7
  %s10 = scalar_select 0, %s9, %s7
  $region1: #{tpu_custom_call.1} parent=0
    #allocation3 [shape = 'u8[32768]{0}', space=vmem, size = 0x8000, scoped, tag = 'input window, operand 0, single buffered']
    #allocation4 [shape = 's32[1]{0}', space=sflag, size = 0x4, scoped, tag = 'scoped memory for tpu_custom_call.1']
    #allocation5 [shape = 's32[1]{0}', space=sflag, size = 0x4, scoped, tag = 'scoped memory for tpu_custom_call.1']
    #allocation6 [shape = 'u8[65536]{0}', space=vmem, size = 0x10000, scoped, tag = 'input window, operand 1, single buffered']
    #allocation7 [shape = 's32[1]{0}', space=sflag, size = 0x4, scoped, tag = 'scoped memory for tpu_custom_call.1']
    #allocation8 [shape = 'u8[32768]{0}', space=vmem, size = 0x8000, scoped, tag = 'input window, operand 3, single buffered']
    #allocation9 [shape = 'u8[4096]{0}', space=vmem, size = 0x1000, scoped, tag = 'output window, operand 0, single buffered']
    %11 = vsyncpa [#allocation4], 0
    %12 = vsyncpa [#allocation7], 0
    %13 = vsyncpa [#allocation5], 0
    // Predicated region
    $region2: #{tpu_custom_call.1} parent=1 // pred_check
      _
    $region3: #{tpu_custom_call.1} parent=1 // pred_check_branch
      %15 = sbr.rel (0) target = $region5
    $region4: #{tpu_custom_call.1} parent=1 // pred_region
      %s17 = ssub.s32 1024, 1024
      %18 = vsyncadd [#allocation4], %s17
      %s19 = sshll.u32 [#allocation3], 4
      %s20 = int_to_ptr.vmem [resolvable:$true] %s19
      %25 = dma.hbm_to_vmem [thread:$0]  %s0, 1024, %s20, [#allocation4], 128, 128, 8
    $region5: #{tpu_custom_call.1} parent=1 // pred_fallthru
      _
    // Predicated region
    $region6: #{tpu_custom_call.1} parent=1 // pred_check
      _
    $region7: #{tpu_custom_call.1} parent=1 // pred_check_branch
      %27 = sbr.rel (0) target = $region9
    $region8: #{tpu_custom_call.1} parent=1 // pred_region
      %s29 = ssub.s32 2048, 2048
      %30 = vsyncadd [#allocation7], %s29
      %s31 = sshll.u32 [#allocation6], 4
      %s32 = int_to_ptr.vmem [resolvable:$true] %s31
      %37 = dma.hbm_to_vmem [thread:$0]  %s1, 2048, %s32, [#allocation7], 64, 64, 4
    $region9: #{tpu_custom_call.1} parent=1 // pred_fallthru
      _
    // Predicated region
    $region10: #{tpu_custom_call.1} parent=1 // pred_check
      _
    $region11: #{tpu_custom_call.1} parent=1 // pred_check_branch
      %39 = sbr.rel (0) target = $region13
    $region12: #{tpu_custom_call.1} parent=1 // pred_region
      _
    $region13: #{tpu_custom_call.1} parent=1 // pred_fallthru
      _
    // Predicated region
    $region14: #{tpu_custom_call.1} parent=1 // pred_check
      _
    $region15: #{tpu_custom_call.1} parent=1 // pred_check_branch
      %41 = sbr.rel (0) target = $region17
    $region16: #{tpu_custom_call.1} parent=1 // pred_region
      %s43 = ssub.s32 1024, 1024
      %44 = vsyncadd [#allocation7], %s43
      %s45 = sshll.u32 [#allocation8], 4
      %s46 = int_to_ptr.vmem [resolvable:$true] %s45
      %51 = dma.hbm_to_vmem [thread:$0]  %s3, 1024, %s46, [#allocation7], 64, 64, 4
    $region17: #{tpu_custom_call.1} parent=1 // pred_fallthru
      _
    // Predicated region
    $region18: #{tpu_custom_call.1} parent=1 // pred_check
      _
    $region19: #{tpu_custom_call.1} parent=1 // pred_check_branch
      %53 = sbr.rel (0) target = $region21
    $region20: #{tpu_custom_call.1} parent=1 // pred_region
      _
    $region21: #{tpu_custom_call.1} parent=1 // pred_fallthru
      _
    // Predicated region
    $region22: #{tpu_custom_call.1} parent=1 // pred_check
      _
    $region23: #{tpu_custom_call.1} parent=1 // pred_check_branch
      %55 = sbr.rel (0) target = $region25
    $region24: #{tpu_custom_call.1} parent=1 // pred_region
      _
    $region25: #{tpu_custom_call.1} parent=1 // pred_fallthru
      _
    // Predicated region
    $region26: #{tpu_custom_call.1} parent=1 // pred_check
      _
    $region27: #{tpu_custom_call.1} parent=1 // pred_check_branch
      %57 = sbr.rel (0) target = $region29
    $region28: #{tpu_custom_call.1} parent=1 // pred_region
      %58 = dma.done [#allocation4], 1024
    $region29: #{tpu_custom_call.1} parent=1 // pred_fallthru
      _
    // Predicated region
    $region30: #{tpu_custom_call.1} parent=1 // pred_check
      _
    $region31: #{tpu_custom_call.1} parent=1 // pred_check_branch
      %60 = sbr.rel (0) target = $region33
    $region32: #{tpu_custom_call.1} parent=1 // pred_region
      %61 = dma.done [#allocation7], 2048
    $region33: #{tpu_custom_call.1} parent=1 // pred_fallthru
      _
    // Predicated region
    $region34: #{tpu_custom_call.1} parent=1 // pred_check
      _
    $region35: #{tpu_custom_call.1} parent=1 // pred_check_branch
      %63 = sbr.rel (0) target = $region37
    $region36: #{tpu_custom_call.1} parent=1 // pred_region
      %64 = dma.done [#allocation7], 1024
    $region37: #{tpu_custom_call.1} parent=1 // pred_fallthru
      _
    %p66 = scmp.eq.s32.totalorder 0, 0
    // Predicated region
    $region38: #{tpu_custom_call.1} parent=1 // pred_check
      %p67 = pneg %p66
    $region39: #{tpu_custom_call.1} parent=1 // pred_check_branch
      %69 = sbr.rel (%p67) target = $region41
    $region40: #{tpu_custom_call.1} parent=1 // pred_region
      %70 = vst [vmem:[#allocation2] sm:$0xff] 0.0
    $region41: #{tpu_custom_call.1} parent=1 // pred_fallthru
      _
    %v71 = vld [vmem:[#allocation3] sm:$0xff]
    %v72 = vld [vmem:[#allocation3 + $0x8] sm:$0xff]
    %v73 = vld [vmem:[#allocation3 + $0x10] sm:$0xff]
    %v74 = vld [vmem:[#allocation3 + $0x18] sm:$0xff]
    %v75 = vld [vmem:[#allocation3 + $0x20] sm:$0xff]
    %v76 = vld [vmem:[#allocation3 + $0x28] sm:$0xff]
    %v77 = vld [vmem:[#allocation3 + $0x30] sm:$0xff]
    %v78 = vld [vmem:[#allocation3 + $0x38] sm:$0xff]
    %v79 = vld [vmem:[#allocation6] sm:$0xf]
    %v80 = vld [vmem:[#allocation6 + $0x4] sm:$0xf]
    %v81 = vld [vmem:[#allocation6 + $0x8] sm:$0xf]
    %v82 = vld [vmem:[#allocation6 + $0xc] sm:$0xf]
    %v83 = vld [vmem:[#allocation6 + $0x10] sm:$0xf]
    %v84 = vld [vmem:[#allocation6 + $0x14] sm:$0xf]
    %v85 = vld [vmem:[#allocation6 + $0x18] sm:$0xf]
    %v86 = vld [vmem:[#allocation6 + $0x1c] sm:$0xf]
    %v87 = vld [vmem:[#allocation6 + $0x20] sm:$0xf]
    %v88 = vld [vmem:[#allocation6 + $0x24] sm:$0xf]
    %v89 = vld [vmem:[#allocation6 + $0x28] sm:$0xf]
    %v90 = vld [vmem:[#allocation6 + $0x2c] sm:$0xf]
    %v91 = vld [vmem:[#allocation6 + $0x30] sm:$0xf]
    %v92 = vld [vmem:[#allocation6 + $0x34] sm:$0xf]
    %v93 = vld [vmem:[#allocation6 + $0x38] sm:$0xf]
    %v94 = vld [vmem:[#allocation6 + $0x3c] sm:$0xf]
    %v95 = vld [vmem:[#allocation6 + $0x40] sm:$0xf]
    %v96 = vld [vmem:[#allocation6 + $0x44] sm:$0xf]
    %v97 = vld [vmem:[#allocation6 + $0x48] sm:$0xf]
    %v98 = vld [vmem:[#allocation6 + $0x4c] sm:$0xf]
    %v99 = vld [vmem:[#allocation6 + $0x50] sm:$0xf]
    %v100 = vld [vmem:[#allocation6 + $0x54] sm:$0xf]
    %v101 = vld [vmem:[#allocation6 + $0x58] sm:$0xf]
    %v102 = vld [vmem:[#allocation6 + $0x5c] sm:$0xf]
    %v103 = vld [vmem:[#allocation6 + $0x60] sm:$0xf]
    %v104 = vld [vmem:[#allocation6 + $0x64] sm:$0xf]
    %v105 = vld [vmem:[#allocation6 + $0x68] sm:$0xf]
    %v106 = vld [vmem:[#allocation6 + $0x6c] sm:$0xf]
    %v107 = vld [vmem:[#allocation6 + $0x70] sm:$0xf]
    %v108 = vld [vmem:[#allocation6 + $0x74] sm:$0xf]
    %v109 = vld [vmem:[#allocation6 + $0x78] sm:$0xf]
    %v110 = vld [vmem:[#allocation6 + $0x7c] sm:$0xf]
    %v111 = vld [vmem:[%s2] sm:$0x1]
    %v113 = vlaneseq
    %v114 = vshrl.u32 %v113, 7
    %v115 = vsub.s32 0, %v114
    %v116 = vrot.slane %v111, %v115
    %v126 = vunpack.c.l.b16 %v71
    %v127 = vunpack.c.h.b16 %v71
    %v128 = vunpack.c.l.b16 %v72
    %v129 = vunpack.c.h.b16 %v72
    %v130 = vunpack.c.l.b16 %v73
    %v131 = vunpack.c.h.b16 %v73
    %v132 = vunpack.c.l.b16 %v74
    %v133 = vunpack.c.h.b16 %v74
    %v134 = vunpack.c.l.b16 %v75
    %v135 = vunpack.c.h.b16 %v75
    %v136 = vunpack.c.l.b16 %v76
    %v137 = vunpack.c.h.b16 %v76
    %v138 = vunpack.c.l.b16 %v77
    %v139 = vunpack.c.h.b16 %v77
    %v140 = vunpack.c.l.b16 %v78
    %v141 = vunpack.c.h.b16 %v78
    %v142 = vpack.c.b16 %v128, %v126
    %v143 = vpack.c.b16 %v129, %v127
    %v144 = vpack.c.b16 %v132, %v130
    %v145 = vpack.c.b16 %v133, %v131
    %v146 = vpack.c.b16 %v136, %v134
    %v147 = vpack.c.b16 %v137, %v135
    %v148 = vpack.c.b16 %v140, %v138
    %v149 = vpack.c.b16 %v141, %v139
    %v190 = vunpack.c.l.b16 %v79
    %v191 = vunpack.c.l.b16 %v80
    %v192 = vunpack.c.l.b16 %v81
    %v193 = vunpack.c.l.b16 %v82
    %v194 = vunpack.c.l.b16 %v83
    %v195 = vunpack.c.l.b16 %v84
    %v196 = vunpack.c.l.b16 %v85
    %v197 = vunpack.c.l.b16 %v86
    %v198 = vunpack.c.l.b16 %v87
    %v199 = vunpack.c.l.b16 %v88
    %v200 = vunpack.c.l.b16 %v89
    %v201 = vunpack.c.l.b16 %v90
    %v202 = vunpack.c.l.b16 %v91
    %v203 = vunpack.c.l.b16 %v92
    %v204 = vunpack.c.l.b16 %v93
    %v205 = vunpack.c.l.b16 %v94
    %v206 = vunpack.c.l.b16 %v95
    %v207 = vunpack.c.l.b16 %v96
    %v208 = vunpack.c.l.b16 %v97
    %v209 = vunpack.c.l.b16 %v98
    %v210 = vunpack.c.l.b16 %v99
    %v211 = vunpack.c.l.b16 %v100
    %v212 = vunpack.c.l.b16 %v101
    %v213 = vunpack.c.l.b16 %v102
    %v214 = vunpack.c.l.b16 %v103
    %v215 = vunpack.c.l.b16 %v104
    %v216 = vunpack.c.l.b16 %v105
    %v217 = vunpack.c.l.b16 %v106
    %v218 = vunpack.c.l.b16 %v107
    %v219 = vunpack.c.l.b16 %v108
    %v220 = vunpack.c.l.b16 %v109
    %v221 = vunpack.c.l.b16 %v110
    %v222 = vpack.c.b16 %v191, %v190
    %v223 = vpack.c.b16 %v193, %v192
    %v224 = vpack.c.b16 %v195, %v194
    %v225 = vpack.c.b16 %v197, %v196
    %v226 = vpack.c.b16 %v199, %v198
    %v227 = vpack.c.b16 %v201, %v200
    %v228 = vpack.c.b16 %v203, %v202
    %v229 = vpack.c.b16 %v205, %v204
    %v230 = vpack.c.b16 %v207, %v206
    %v231 = vpack.c.b16 %v209, %v208
    %v232 = vpack.c.b16 %v211, %v210
    %v233 = vpack.c.b16 %v213, %v212
    %v234 = vpack.c.b16 %v215, %v214
    %v235 = vpack.c.b16 %v217, %v216
    %v236 = vpack.c.b16 %v219, %v218
    %v237 = vpack.c.b16 %v221, %v220
    %254 = vmatprep.subr.bf16.mxu0 0
    %255 = vmatpush1.bf16.msra.mxu0 %v222
    %256 = vmatprep.subr.bf16.mxu0 0
    %257 = vmatpush1.bf16.msra.mxu0 %v223
    %258 = vmatprep.subr.bf16.mxu0 0
    %259 = vmatpush1.bf16.msra.mxu0 %v224
    %260 = vmatprep.subr.bf16.mxu0 0
    %261 = vmatpush1.bf16.msra.mxu0 %v225
    %262 = vmatprep.subr.bf16.mxu0 0
    %263 = vmatpush1.bf16.msra.mxu0 %v226
    %264 = vmatprep.subr.bf16.mxu0 0
    %265 = vmatpush1.bf16.msra.mxu0 %v227
    %266 = vmatprep.subr.bf16.mxu0 0
    %267 = vmatpush1.bf16.msra.mxu0 %v228
    %268 = vmatprep.subr.bf16.mxu0 0
    %269 = vmatpush1.bf16.msra.mxu0 %v229
    %270 = vmatprep.subr.bf16.mxu0 0
    %271 = vmatpush1.bf16.msra.mxu0 %v230
    %272 = vmatprep.subr.bf16.mxu0 0
    %273 = vmatpush1.bf16.msra.mxu0 %v231
    %274 = vmatprep.subr.bf16.mxu0 0
    %275 = vmatpush1.bf16.msra.mxu0 %v232
    %276 = vmatprep.subr.bf16.mxu0 0
    %277 = vmatpush1.bf16.msra.mxu0 %v233
    %278 = vmatprep.subr.bf16.mxu0 0
    %279 = vmatpush1.bf16.msra.mxu0 %v234
    %280 = vmatprep.subr.bf16.mxu0 0
    %281 = vmatpush1.bf16.msra.mxu0 %v235
    %282 = vmatprep.subr.bf16.mxu0 0
    %283 = vmatpush1.bf16.msra.mxu0 %v236
    %284 = vmatprep.subr.bf16.mxu0 0
    %285 = vmatpush1.bf16.msra.mxu0 %v237
    %286 = vmatprep.mubr.bf16.mxu0 %v143
    %287 = vmatmul.mubr.bf16.gmra.mrb[0].mxu0 %v142
    %v288 = vpop.f32.mrb[0].mxu0
    %v289 = vadd.f32 %v116, %v288
    %v290 = vpop.f32.mrb[0].mxu0
    %v291 = vpop.f32.mrb[0].mxu0
    %v292 = vadd.f32 %v116, %v291
    %v293 = vpop.f32.mrb[0].mxu0
    %294 = vmatprep.mubr.bf16.mxu0 %v145
    %295 = vmatmul.mubr.bf16.gmra.mrb[0].mxu0 %v144
    %v296 = vpop.f32.mrb[0].mxu0
    %v297 = vadd.f32 %v116, %v296
    %v298 = vpop.f32.mrb[0].mxu0
    %v299 = vpop.f32.mrb[0].mxu0
    %v300 = vadd.f32 %v116, %v299
    %v301 = vpop.f32.mrb[0].mxu0
    %302 = vmatprep.mubr.bf16.mxu0 %v147
    %303 = vmatmul.mubr.bf16.gmra.mrb[0].mxu0 %v146
    %v304 = vpop.f32.mrb[0].mxu0
    %v305 = vadd.f32 %v116, %v304
    %v306 = vpop.f32.mrb[0].mxu0
    %v307 = vpop.f32.mrb[0].mxu0
    %v308 = vadd.f32 %v116, %v307
    %v309 = vpop.f32.mrb[0].mxu0
    %310 = vmatprep.mubr.bf16.mxu0 %v149
    %311 = vmatmul.mubr.bf16.gmra.mrb[0].mxu0 %v148
    %v312 = vpop.f32.mrb[0].mxu0
    %v313 = vadd.f32 %v116, %v312
    %v314 = vpop.f32.mrb[0].mxu0
    %v315 = vpop.f32.mrb[0].mxu0
    %v316 = vadd.f32 %v116, %v315
    %v317 = vpop.f32.mrb[0].mxu0
    %318 = vdwg.mxu0
    %v319 = vmul.f32 %v289, %v289
    %v320 = vmul.f32 %v292, %v292
    %v321 = vmul.f32 %v297, %v297
    %v322 = vmul.f32 %v300, %v300
    %v323 = vmul.f32 %v305, %v305
    %v324 = vmul.f32 %v308, %v308
    %v325 = vmul.f32 %v313, %v313
    %v326 = vmul.f32 %v316, %v316
    %v327 = vmul.f32 %v289, %v319
    %v328 = vmul.f32 %v292, %v320
    %v329 = vmul.f32 %v297, %v321
    %v330 = vmul.f32 %v300, %v322
    %v331 = vmul.f32 %v305, %v323
    %v332 = vmul.f32 %v308, %v324
    %v333 = vmul.f32 %v313, %v325
    %v334 = vmul.f32 %v316, %v326
    %v335 = vmul.f32 %v327, 0.044715
    %v336 = vmul.f32 %v328, 0.044715
    %v337 = vmul.f32 %v329, 0.044715
    %v338 = vmul.f32 %v330, 0.044715
    %v339 = vmul.f32 %v331, 0.044715
    %v340 = vmul.f32 %v332, 0.044715
    %v341 = vmul.f32 %v333, 0.044715
    %v342 = vmul.f32 %v334, 0.044715
    %v343 = vadd.f32 %v289, %v335
    %v344 = vadd.f32 %v292, %v336
    %v345 = vadd.f32 %v297, %v337
    %v346 = vadd.f32 %v300, %v338
    %v347 = vadd.f32 %v305, %v339
    %v348 = vadd.f32 %v308, %v340
    %v349 = vadd.f32 %v313, %v341
    %v350 = vadd.f32 %v316, %v342
    %v351 = vmul.f32 %v343, 0.7978846
    %v352 = vmul.f32 %v344, 0.7978846
    %v353 = vmul.f32 %v345, 0.7978846
    %v354 = vmul.f32 %v346, 0.7978846
    %v355 = vmul.f32 %v347, 0.7978846
    %v356 = vmul.f32 %v348, 0.7978846
    %v357 = vmul.f32 %v349, 0.7978846
    %v358 = vmul.f32 %v350, 0.7978846
    %v359 = vtanh.pop %v351
    %v360 = vtanh.pop %v352
    %v361 = vtanh.pop %v353
    %v362 = vtanh.pop %v354
    %v363 = vtanh.pop %v355
    %v364 = vtanh.pop %v356
    %v365 = vtanh.pop %v357
    %v366 = vtanh.pop %v358
    %v367 = vadd.f32 %v359, 1.0
    %v368 = vadd.f32 %v360, 1.0
    %v369 = vadd.f32 %v361, 1.0
    %v370 = vadd.f32 %v362, 1.0
    %v371 = vadd.f32 %v363, 1.0
    %v372 = vadd.f32 %v364, 1.0
    %v373 = vadd.f32 %v365, 1.0
    %v374 = vadd.f32 %v366, 1.0
    %v375 = vmul.f32 %v367, 0.5
    %v376 = vmul.f32 %v368, 0.5
    %v377 = vmul.f32 %v369, 0.5
    %v378 = vmul.f32 %v370, 0.5
    %v379 = vmul.f32 %v371, 0.5
    %v380 = vmul.f32 %v372, 0.5
    %v381 = vmul.f32 %v373, 0.5
    %v382 = vmul.f32 %v374, 0.5
    %v383 = vmul.f32 %v289, %v375
    %v384 = vmul.f32 %v292, %v376
    %v385 = vmul.f32 %v297, %v377
    %v386 = vmul.f32 %v300, %v378
    %v387 = vmul.f32 %v305, %v379
    %v388 = vmul.f32 %v308, %v380
    %v389 = vmul.f32 %v313, %v381
    %v390 = vmul.f32 %v316, %v382
    %v391 = vld [vmem:[#allocation2] sm:$0xff]
    %v392 = vld [vmem:[%s5] sm:$0xff]
    %vm393 = vcmask 523264
    %v395 = vsel %vm393, %v392, 0
    %397 = vmatprep.subr.mxu0 0.0
    %398 = vmatpush1.msra.mxu0 %v383
    %399 = vmatprep.subr.mxu0 0.0
    %400 = vmatpush1.msra.mxu0 %v384
    %401 = vmatprep.subr.mxu0 0.0
    %402 = vmatpush1.msra.mxu0 %v385
    %403 = vmatprep.subr.mxu0 0.0
    %404 = vmatpush1.msra.mxu0 %v386
    %405 = vmatprep.subr.mxu0 0.0
    %406 = vmatpush1.msra.mxu0 %v387
    %407 = vmatprep.subr.mxu0 0.0
    %408 = vmatpush1.msra.mxu0 %v388
    %409 = vmatprep.subr.mxu0 0.0
    %410 = vmatpush1.msra.mxu0 %v389
    %411 = vmatprep.subr.mxu0 0.0
    %412 = vmatpush1.msra.mxu0 %v390
    %413 = vmatprep.subr.mxu0 0.0
    %414 = vmatpush1.msra.mxu0 0.0
    %415 = vmatprep.subr.mxu0 0.0
    %416 = vmatpush1.msra.mxu0 0.0
    %417 = vmatprep.subr.mxu0 0.0
    %418 = vmatpush1.msra.mxu0 0.0
    %419 = vmatprep.subr.mxu0 0.0
    %420 = vmatpush1.msra.mxu0 0.0
    %421 = vmatprep.subr.mxu0 0.0
    %422 = vmatpush1.msra.mxu0 0.0
    %423 = vmatprep.subr.mxu0 0.0
    %424 = vmatpush1.msra.mxu0 0.0
    %425 = vmatprep.subr.mxu0 0.0
    %426 = vmatpush1.msra.mxu0 0.0
    %427 = vmatprep.subr.mxu0 0.0
    %428 = vmatpush1.msra.mxu0 0.0
    %429 = vmatprep.subr.mxu0 0.0
    %430 = vmatpush1.msra.mxu0 0.0
    %431 = vmatprep.subr.mxu0 0.0
    %432 = vmatpush1.msra.mxu0 0.0
    %433 = vmatprep.subr.mxu0 0.0
    %434 = vmatpush1.msra.mxu0 0.0
    %435 = vmatprep.subr.mxu0 0.0
    %436 = vmatpush1.msra.mxu0 0.0
    %437 = vmatprep.subr.mxu0 0.0
    %438 = vmatpush1.msra.mxu0 0.0
    %439 = vmatprep.subr.mxu0 0.0
    %440 = vmatpush1.msra.mxu0 0.0
    %441 = vmatprep.subr.mxu0 0.0
    %442 = vmatpush1.msra.mxu0 0.0
    %443 = vmatprep.subr.mxu0 0.0
    %444 = vmatpush1.msra.mxu0 0.0
    %445 = vmatprep.subr.mxu0 0.0
    %446 = vmatpush1.msra.mxu0 0.0
    %447 = vmatprep.subr.mxu0 0.0
    %448 = vmatpush1.msra.mxu0 0.0
    %449 = vmatprep.subr.mxu0 0.0
    %450 = vmatpush1.msra.mxu0 0.0
    %451 = vmatprep.subr.mxu0 0.0
    %452 = vmatpush1.msra.mxu0 0.0
    %453 = vmatprep.subr.mxu0 0.0
    %454 = vmatpush1.msra.mxu0 0.0
    %455 = vmatprep.subr.mxu0 0.0
    %456 = vmatpush1.msra.mxu0 0.0
    %457 = vmatprep.subr.mxu0 0.0
    %458 = vmatpush1.msra.mxu0 0.0
    %459 = vmatprep.subr.mxu0 0.0
    %460 = vmatpush1.msra.mxu0 0.0
    %461 = vmatprep.mubr.f32.mxu0 0.0
    %462 = vmatmul.mubr.f32.gmra.mrb[0].mxu0 %v395
    %v463 = vpop.f32.mrb[0].mxu0
    %v464 = vadd.f32 0.0, %v463
    %v465 = vpop.f32.mrb[0].mxu0
    %466 = vdwg.mxu0
    %v467 = vadd.f32 %v391, %v464
    %468 = vst [vmem:[#allocation2] sm:$0xff] %v467
    // Predicated region
    $region42: #{tpu_custom_call.1} parent=1 // pred_check
      %p469 = pneg %p66
    $region43: #{tpu_custom_call.1} parent=1 // pred_check_branch
      %471 = sbr.rel (%p469) target = $region45
    $region44: #{tpu_custom_call.1} parent=1 // pred_region
      %v472 = vld [vmem:[#allocation2] sm:$0xff]
      %v473 = vld [vmem:[%s2] sm:$0x1]
      %v474 = vmul.f32 %v473, %v473
      %v475 = vmul.f32 %v473, %v474
      %v476 = vmul.f32 %v475, 0.044715
      %v477 = vadd.f32 %v473, %v476
      %v478 = vmul.f32 %v477, 0.7978846
      %v479 = vtanh.pop %v478
      %v480 = vadd.f32 %v479, 1.0
      %v481 = vmul.f32 %v480, 0.5
      %v482 = vmul.f32 %v473, %v481
      %v483 = vmul.f32 %v482, 4.0
      %v485 = vlaneseq
      %v486 = vshrl.u32 %v485, 7
      %v487 = vsub.s32 0, %v486
      %v488 = vrot.slane %v483, %v487
      %v490 = vsub.f32 %v472, %v488
      %v491 = vmul.f32 %v490, 0.25
      %v492 = vpack.c.bf16 %v491, %v491
      %v493 = vld [vmem:[#allocation8] sm:$0xf]
      %v494 = vld [vmem:[#allocation8 + $0x4] sm:$0xf]
      %v495 = vld [vmem:[#allocation8 + $0x8] sm:$0xf]
      %v496 = vld [vmem:[#allocation8 + $0xc] sm:$0xf]
      %v497 = vld [vmem:[#allocation8 + $0x10] sm:$0xf]
      %v498 = vld [vmem:[#allocation8 + $0x14] sm:$0xf]
      %v499 = vld [vmem:[#allocation8 + $0x18] sm:$0xf]
      %v500 = vld [vmem:[#allocation8 + $0x1c] sm:$0xf]
      %v501 = vld [vmem:[#allocation8 + $0x20] sm:$0xf]
      %v502 = vld [vmem:[#allocation8 + $0x24] sm:$0xf]
      %v503 = vld [vmem:[#allocation8 + $0x28] sm:$0xf]
      %v504 = vld [vmem:[#allocation8 + $0x2c] sm:$0xf]
      %v505 = vld [vmem:[#allocation8 + $0x30] sm:$0xf]
      %v506 = vld [vmem:[#allocation8 + $0x34] sm:$0xf]
      %v507 = vld [vmem:[#allocation8 + $0x38] sm:$0xf]
      %v508 = vld [vmem:[#allocation8 + $0x3c] sm:$0xf]
      %v509 = vld [vmem:[%s4] sm:$0x1]
      %v511 = vlaneseq
      %v512 = vshrl.u32 %v511, 7
      %v513 = vsub.s32 0, %v512
      %v514 = vrot.slane %v509, %v513
      %v532 = vunpack.c.l.b16 %v493
      %v533 = vunpack.c.l.b16 %v494
      %v534 = vunpack.c.l.b16 %v495
      %v535 = vunpack.c.l.b16 %v496
      %v536 = vunpack.c.l.b16 %v497
      %v537 = vunpack.c.l.b16 %v498
      %v538 = vunpack.c.l.b16 %v499
      %v539 = vunpack.c.l.b16 %v500
      %v540 = vunpack.c.l.b16 %v501
      %v541 = vunpack.c.l.b16 %v502
      %v542 = vunpack.c.l.b16 %v503
      %v543 = vunpack.c.l.b16 %v504
      %v544 = vunpack.c.l.b16 %v505
      %v545 = vunpack.c.l.b16 %v506
      %v546 = vunpack.c.l.b16 %v507
      %v547 = vunpack.c.l.b16 %v508
      %v548 = vpack.c.b16 %v533, %v532
      %v549 = vpack.c.b16 %v535, %v534
      %v550 = vpack.c.b16 %v537, %v536
      %v551 = vpack.c.b16 %v539, %v538
      %v552 = vpack.c.b16 %v541, %v540
      %v553 = vpack.c.b16 %v543, %v542
      %v554 = vpack.c.b16 %v545, %v544
      %v555 = vpack.c.b16 %v547, %v546
      %564 = vmatprep.subr.bf16.mxu0 0
      %565 = vmatpush1.bf16.msra.mxu0 %v548
      %566 = vmatprep.subr.bf16.mxu0 0
      %567 = vmatpush1.bf16.msra.mxu0 %v549
      %568 = vmatprep.subr.bf16.mxu0 0
      %569 = vmatpush1.bf16.msra.mxu0 %v550
      %570 = vmatprep.subr.bf16.mxu0 0
      %571 = vmatpush1.bf16.msra.mxu0 %v551
      %572 = vmatprep.subr.bf16.mxu0 0
      %573 = vmatpush1.bf16.msra.mxu0 %v552
      %574 = vmatprep.subr.bf16.mxu0 0
      %575 = vmatpush1.bf16.msra.mxu0 %v553
      %576 = vmatprep.subr.bf16.mxu0 0
      %577 = vmatpush1.bf16.msra.mxu0 %v554
      %578 = vmatprep.subr.bf16.mxu0 0
      %579 = vmatpush1.bf16.msra.mxu0 %v555
      %580 = vmatprep.subr.bf16.mxu0 0
      %581 = vmatpush1.bf16.msra.mxu0 0
      %582 = vmatprep.subr.bf16.mxu0 0
      %583 = vmatpush1.bf16.msra.mxu0 0
      %584 = vmatprep.subr.bf16.mxu0 0
      %585 = vmatpush1.bf16.msra.mxu0 0
      %586 = vmatprep.subr.bf16.mxu0 0
      %587 = vmatpush1.bf16.msra.mxu0 0
      %588 = vmatprep.subr.bf16.mxu0 0
      %589 = vmatpush1.bf16.msra.mxu0 0
      %590 = vmatprep.subr.bf16.mxu0 0
      %591 = vmatpush1.bf16.msra.mxu0 0
      %592 = vmatprep.subr.bf16.mxu0 0
      %593 = vmatpush1.bf16.msra.mxu0 0
      %594 = vmatprep.subr.bf16.mxu0 0
      %595 = vmatpush1.bf16.msra.mxu0 0
      %596 = vmatprep.mubr.bf16.mxu0 0
      %597 = vmatmul.mubr.bf16.gmra.mrb[0].mxu0 %v492
      %v598 = vpop.f32.mrb[0].mxu0
      %v599 = vadd.f32 %v514, %v598
      %v600 = vpop.f32.mrb[0].mxu0
      %v601 = vpop.f32.mrb[0].mxu0
      %v602 = vpop.f32.mrb[0].mxu0
      %603 = vdwg.mxu0
      %604 = vst [vmem:[#allocation9] sm:$0xff] %v599
    $region45: #{tpu_custom_call.1} parent=1 // pred_fallthru
      _
    // Predicated region
    $region46: #{tpu_custom_call.1} parent=1 // pred_check
      _
    $region47: #{tpu_custom_call.1} parent=1 // pred_check_branch
      %606 = sbr.rel (0) target = $region49
    $region48: #{tpu_custom_call.1} parent=1 // pred_region
      %s608 = ssub.s32 128, 128
      %609 = vsyncadd [#allocation5], %s608
      %s611 = sshll.u32 [#allocation9], 4
      %s612 = int_to_ptr.vmem [resolvable:$true] %s611
      %614 = dma.vmem_to_hbm [thread:$0]  %s612, 128, %s6, [#allocation5]
    $region49: #{tpu_custom_call.1} parent=1 // pred_fallthru
      _
    // Predicated region
    $region50: #{tpu_custom_call.1} parent=1 // pred_check
      _
    $region51: #{tpu_custom_call.1} parent=1 // pred_check_branch
      %616 = sbr.rel (0) target = $region53
    $region52: #{tpu_custom_call.1} parent=1 // pred_region
      %617 = dma.done [#allocation5], 128
    $region53: #{tpu_custom_call.1} parent=1 // pred_fallthru
      _
    %618 = vsyncpa [#allocation4], 1
    %619 = vsyncpa [#allocation7], 1
    %620 = vsyncpa [#allocation5], 1

// kernel: tpu_custom_call.1
$region0: #{tpu_custom_call.1}
  #allocation0 [shape = 'u32[]', space=smem, size = 0x4, offset = 0x4, fixed_abs, tag = 'smem constant byte address 0x4 - core index']
  #allocation1 [shape = 'u32[144,128]{1,0:T(1,128)}', space=vmem, size = 0x12000, scoped, tag = 'internal scratch']
  #allocation2 [shape = 'f32[8,128]{1,0:T(8,128)}', space=vmem, size = 0x1000, scoped, tag = 'scratch operand']
  %s0 = inlined_call_operand.hbm [shape: bf16[8,8,256], index: 0, kind: input, shape index: {}]
  %s1 = inlined_call_operand.hbm [shape: bf16[256,128], index: 1, kind: input, shape index: {}]
  %s2 = inlined_call_operand.vmem [shape: f32[1,128], index: 2, kind: input, shape index: {}]
  %s3 = inlined_call_operand.hbm [shape: bf16[128,128], index: 3, kind: input, shape index: {}]
  %s4 = inlined_call_operand.vmem [shape: f32[1,128], index: 4, kind: input, shape index: {}]
  %s5 = inlined_call_operand.vmem [shape: f32[8,64], index: 5, kind: input, shape index: {}]
  %s6 = inlined_call_operand.hbm [shape: f32[8,128], index: 6, kind: output, shape index: {}]
  %s7 = sld [smem:[#allocation0]]
  $region54: #{tpu_custom_call.1} parent=0
    _
  %s9 = ssub.s32 1, %s7
  %s10 = scalar_select 0, %s9, %s7
  $region1: #{tpu_custom_call.1} parent=0
    #allocation3 [shape = 'u8[32768]{0}', space=vmem, size = 0x8000, scoped, tag = 'input window, operand 0, single buffered']
    #allocation4 [shape = 's32[1]{0}', space=sflag, size = 0x4, scoped, tag = 'scoped memory for tpu_custom_call.1']
    #allocation5 [shape = 's32[1]{0}', space=sflag, size = 0x4, scoped, tag = 'scoped memory for tpu_custom_call.1']
    #allocation6 [shape = 'u8[65536]{0}', space=vmem, size = 0x10000, scoped, tag = 'input window, operand 1, single buffered']
    #allocation7 [shape = 's32[1]{0}', space=sflag, size = 0x4, scoped, tag = 'scoped memory for tpu_custom_call.1']
    #allocation8 [shape = 'u8[32768]{0}', space=vmem, size = 0x8000, scoped, tag = 'input window, operand 3, single buffered']
    #allocation9 [shape = 'u8[4096]{0}', space=vmem, size = 0x1000, scoped, tag = 'output window, operand 0, single buffered']
    %11 = vsyncpa [#allocation4], 0
    %12 = vsyncpa [#allocation7], 0
    %13 = vsyncpa [#allocation5], 0
    // Predicated region
    $region2: #{tpu_custom_call.1} parent=1 // pred_check
      _
    $region3: #{tpu_custom_call.1} parent=1 // pred_check_branch
      %15 = sbr.rel (0) target = $region5
    $region4: #{tpu_custom_call.1} parent=1 // pred_region
      %s17 = ssub.s32 1024, 1024
      %18 = vsyncadd [#allocation4], %s17
      %s19 = sshll.u32 [#allocation3], 4
      %s20 = int_to_ptr.vmem [resolvable:$true] %s19
      %25 = dma.hbm_to_vmem [thread:$0]  %s0, 1024, %s20, [#allocation4], 128, 128, 8
    $region5: #{tpu_custom_call.1} parent=1 // pred_fallthru
      _
    // Predicated region
    $region6: #{tpu_custom_call.1} parent=1 // pred_check
      _
    $region7: #{tpu_custom_call.1} parent=1 // pred_check_branch
      %27 = sbr.rel (0) target = $region9
    $region8: #{tpu_custom_call.1} parent=1 // pred_region
      %s29 = ssub.s32 2048, 2048
      %30 = vsyncadd [#allocation7], %s29
      %s31 = sshll.u32 [#allocation6], 4
      %s32 = int_to_ptr.vmem [resolvable:$true] %s31
      %37 = dma.hbm_to_vmem [thread:$0]  %s1, 2048, %s32, [#allocation7], 64, 64, 4
    $region9: #{tpu_custom_call.1} parent=1 // pred_fallthru
      _
    // Predicated region
    $region10: #{tpu_custom_call.1} parent=1 // pred_check
      _
    $region11: #{tpu_custom_call.1} parent=1 // pred_check_branch
      %39 = sbr.rel (0) target = $region13
    $region12: #{tpu_custom_call.1} parent=1 // pred_region
      _
    $region13: #{tpu_custom_call.1} parent=1 // pred_fallthru
      _
    // Predicated region
    $region14: #{tpu_custom_call.1} parent=1 // pred_check
      _
    $region15: #{tpu_custom_call.1} parent=1 // pred_check_branch
      %41 = sbr.rel (0) target = $region17
    $region16: #{tpu_custom_call.1} parent=1 // pred_region
      %s43 = ssub.s32 1024, 1024
      %44 = vsyncadd [#allocation7], %s43
      %s45 = sshll.u32 [#allocation8], 4
      %s46 = int_to_ptr.vmem [resolvable:$true] %s45
      %51 = dma.hbm_to_vmem [thread:$0]  %s3, 1024, %s46, [#allocation7], 64, 64, 4
    $region17: #{tpu_custom_call.1} parent=1 // pred_fallthru
      _
    // Predicated region
    $region18: #{tpu_custom_call.1} parent=1 // pred_check
      _
    $region19: #{tpu_custom_call.1} parent=1 // pred_check_branch
      %53 = sbr.rel (0) target = $region21
    $region20: #{tpu_custom_call.1} parent=1 // pred_region
      _
    $region21: #{tpu_custom_call.1} parent=1 // pred_fallthru
      _
    // Predicated region
    $region22: #{tpu_custom_call.1} parent=1 // pred_check
      _
    $region23: #{tpu_custom_call.1} parent=1 // pred_check_branch
      %55 = sbr.rel (0) target = $region25
    $region24: #{tpu_custom_call.1} parent=1 // pred_region
      _
    $region25: #{tpu_custom_call.1} parent=1 // pred_fallthru
      _
    // Predicated region
    $region26: #{tpu_custom_call.1} parent=1 // pred_check
      _
    $region27: #{tpu_custom_call.1} parent=1 // pred_check_branch
      %57 = sbr.rel (0) target = $region29
    $region28: #{tpu_custom_call.1} parent=1 // pred_region
      %58 = dma.done [#allocation4], 1024
    $region29: #{tpu_custom_call.1} parent=1 // pred_fallthru
      _
    // Predicated region
    $region30: #{tpu_custom_call.1} parent=1 // pred_check
      _
    $region31: #{tpu_custom_call.1} parent=1 // pred_check_branch
      %60 = sbr.rel (0) target = $region33
    $region32: #{tpu_custom_call.1} parent=1 // pred_region
      %61 = dma.done [#allocation7], 2048
    $region33: #{tpu_custom_call.1} parent=1 // pred_fallthru
      _
    // Predicated region
    $region34: #{tpu_custom_call.1} parent=1 // pred_check
      _
    $region35: #{tpu_custom_call.1} parent=1 // pred_check_branch
      %63 = sbr.rel (0) target = $region37
    $region36: #{tpu_custom_call.1} parent=1 // pred_region
      %64 = dma.done [#allocation7], 1024
    $region37: #{tpu_custom_call.1} parent=1 // pred_fallthru
      _
    %p66 = scmp.eq.s32.totalorder 0, 0
    // Predicated region
    $region38: #{tpu_custom_call.1} parent=1 // pred_check
      %p67 = pneg %p66
    $region39: #{tpu_custom_call.1} parent=1 // pred_check_branch
      %69 = sbr.rel (%p67) target = $region41
    $region40: #{tpu_custom_call.1} parent=1 // pred_region
      %70 = vst [vmem:[#allocation2] sm:$0xff] 0.0
    $region41: #{tpu_custom_call.1} parent=1 // pred_fallthru
      _
    %v71 = vld [vmem:[#allocation3] sm:$0xff]
    %v72 = vld [vmem:[#allocation3 + $0x8] sm:$0xff]
    %v73 = vld [vmem:[#allocation3 + $0x10] sm:$0xff]
    %v74 = vld [vmem:[#allocation3 + $0x18] sm:$0xff]
    %v75 = vld [vmem:[#allocation3 + $0x20] sm:$0xff]
    %v76 = vld [vmem:[#allocation3 + $0x28] sm:$0xff]
    %v77 = vld [vmem:[#allocation3 + $0x30] sm:$0xff]
    %v78 = vld [vmem:[#allocation3 + $0x38] sm:$0xff]
    %v79 = vld [vmem:[#allocation6] sm:$0xf]
    %v80 = vld [vmem:[#allocation6 + $0x4] sm:$0xf]
    %v81 = vld [vmem:[#allocation6 + $0x8] sm:$0xf]
    %v82 = vld [vmem:[#allocation6 + $0xc] sm:$0xf]
    %v83 = vld [vmem:[#allocation6 + $0x10] sm:$0xf]
    %v84 = vld [vmem:[#allocation6 + $0x14] sm:$0xf]
    %v85 = vld [vmem:[#allocation6 + $0x18] sm:$0xf]
    %v86 = vld [vmem:[#allocation6 + $0x1c] sm:$0xf]
    %v87 = vld [vmem:[#allocation6 + $0x20] sm:$0xf]
    %v88 = vld [vmem:[#allocation6 + $0x24] sm:$0xf]
    %v89 = vld [vmem:[#allocation6 + $0x28] sm:$0xf]
    %v90 = vld [vmem:[#allocation6 + $0x2c] sm:$0xf]
    %v91 = vld [vmem:[#allocation6 + $0x30] sm:$0xf]
    %v92 = vld [vmem:[#allocation6 + $0x34] sm:$0xf]
    %v93 = vld [vmem:[#allocation6 + $0x38] sm:$0xf]
    %v94 = vld [vmem:[#allocation6 + $0x3c] sm:$0xf]
    %v95 = vld [vmem:[#allocation6 + $0x40] sm:$0xf]
    %v96 = vld [vmem:[#allocation6 + $0x44] sm:$0xf]
    %v97 = vld [vmem:[#allocation6 + $0x48] sm:$0xf]
    %v98 = vld [vmem:[#allocation6 + $0x4c] sm:$0xf]
    %v99 = vld [vmem:[#allocation6 + $0x50] sm:$0xf]
    %v100 = vld [vmem:[#allocation6 + $0x54] sm:$0xf]
    %v101 = vld [vmem:[#allocation6 + $0x58] sm:$0xf]
    %v102 = vld [vmem:[#allocation6 + $0x5c] sm:$0xf]
    %v103 = vld [vmem:[#allocation6 + $0x60] sm:$0xf]
    %v104 = vld [vmem:[#allocation6 + $0x64] sm:$0xf]
    %v105 = vld [vmem:[#allocation6 + $0x68] sm:$0xf]
    %v106 = vld [vmem:[#allocation6 + $0x6c] sm:$0xf]
    %v107 = vld [vmem:[#allocation6 + $0x70] sm:$0xf]
    %v108 = vld [vmem:[#allocation6 + $0x74] sm:$0xf]
    %v109 = vld [vmem:[#allocation6 + $0x78] sm:$0xf]
    %v110 = vld [vmem:[#allocation6 + $0x7c] sm:$0xf]
    %v111 = vld [vmem:[%s2] sm:$0x1]
    %v113 = vlaneseq
    %v114 = vshrl.u32 %v113, 7
    %v115 = vsub.s32 0, %v114
    %v116 = vrot.slane %v111, %v115
    %v126 = vunpack.c.l.b16 %v71
    %v127 = vunpack.c.h.b16 %v71
    %v128 = vunpack.c.l.b16 %v72
    %v129 = vunpack.c.h.b16 %v72
    %v130 = vunpack.c.l.b16 %v73
    %v131 = vunpack.c.h.b16 %v73
    %v132 = vunpack.c.l.b16 %v74
    %v133 = vunpack.c.h.b16 %v74
    %v134 = vunpack.c.l.b16 %v75
    %v135 = vunpack.c.h.b16 %v75
    %v136 = vunpack.c.l.b16 %v76
    %v137 = vunpack.c.h.b16 %v76
    %v138 = vunpack.c.l.b16 %v77
    %v139 = vunpack.c.h.b16 %v77
    %v140 = vunpack.c.l.b16 %v78
    %v141 = vunpack.c.h.b16 %v78
    %v142 = vpack.c.b16 %v128, %v126
    %v143 = vpack.c.b16 %v129, %v127
    %v144 = vpack.c.b16 %v132, %v130
    %v145 = vpack.c.b16 %v133, %v131
    %v146 = vpack.c.b16 %v136, %v134
    %v147 = vpack.c.b16 %v137, %v135
    %v148 = vpack.c.b16 %v140, %v138
    %v149 = vpack.c.b16 %v141, %v139
    %v190 = vunpack.c.l.b16 %v79
    %v191 = vunpack.c.l.b16 %v80
    %v192 = vunpack.c.l.b16 %v81
    %v193 = vunpack.c.l.b16 %v82
    %v194 = vunpack.c.l.b16 %v83
    %v195 = vunpack.c.l.b16 %v84
    %v196 = vunpack.c.l.b16 %v85
    %v197 = vunpack.c.l.b16 %v86
    %v198 = vunpack.c.l.b16 %v87
    %v199 = vunpack.c.l.b16 %v88
    %v200 = vunpack.c.l.b16 %v89
    %v201 = vunpack.c.l.b16 %v90
    %v202 = vunpack.c.l.b16 %v91
    %v203 = vunpack.c.l.b16 %v92
    %v204 = vunpack.c.l.b16 %v93
    %v205 = vunpack.c.l.b16 %v94
    %v206 = vunpack.c.l.b16 %v95
    %v207 = vunpack.c.l.b16 %v96
    %v208 = vunpack.c.l.b16 %v97
    %v209 = vunpack.c.l.b16 %v98
    %v210 = vunpack.c.l.b16 %v99
    %v211 = vunpack.c.l.b16 %v100
    %v212 = vunpack.c.l.b16 %v101
    %v213 = vunpack.c.l.b16 %v102
    %v214 = vunpack.c.l.b16 %v103
    %v215 = vunpack.c.l.b16 %v104
    %v216 = vunpack.c.l.b16 %v105
    %v217 = vunpack.c.l.b16 %v106
    %v218 = vunpack.c.l.b16 %v107
    %v219 = vunpack.c.l.b16 %v108
    %v220 = vunpack.c.l.b16 %v109
    %v221 = vunpack.c.l.b16 %v110
    %v222 = vpack.c.b16 %v191, %v190
    %v223 = vpack.c.b16 %v193, %v192
    %v224 = vpack.c.b16 %v195, %v194
    %v225 = vpack.c.b16 %v197, %v196
    %v226 = vpack.c.b16 %v199, %v198
    %v227 = vpack.c.b16 %v201, %v200
    %v228 = vpack.c.b16 %v203, %v202
    %v229 = vpack.c.b16 %v205, %v204
    %v230 = vpack.c.b16 %v207, %v206
    %v231 = vpack.c.b16 %v209, %v208
    %v232 = vpack.c.b16 %v211, %v210
    %v233 = vpack.c.b16 %v213, %v212
    %v234 = vpack.c.b16 %v215, %v214
    %v235 = vpack.c.b16 %v217, %v216
    %v236 = vpack.c.b16 %v219, %v218
    %v237 = vpack.c.b16 %v221, %v220
    %254 = vmatprep.subr.bf16.mxu0 0
    %255 = vmatpush1.bf16.msra.mxu0 %v222
    %256 = vmatprep.subr.bf16.mxu0 0
    %257 = vmatpush1.bf16.msra.mxu0 %v223
    %258 = vmatprep.subr.bf16.mxu0 0
    %259 = vmatpush1.bf16.msra.mxu0 %v224
    %260 = vmatprep.subr.bf16.mxu0 0
    %261 = vmatpush1.bf16.msra.mxu0 %v225
    %262 = vmatprep.subr.bf16.mxu0 0
    %263 = vmatpush1.bf16.msra.mxu0 %v226
    %264 = vmatprep.subr.bf16.mxu0 0
    %265 = vmatpush1.bf16.msra.mxu0 %v227
    %266 = vmatprep.subr.bf16.mxu0 0
    %267 = vmatpush1.bf16.msra.mxu0 %v228
    %268 = vmatprep.subr.bf16.mxu0 0
    %269 = vmatpush1.bf16.msra.mxu0 %v229
    %270 = vmatprep.subr.bf16.mxu0 0
    %271 = vmatpush1.bf16.msra.mxu0 %v230
    %272 = vmatprep.subr.bf16.mxu0 0
    %273 = vmatpush1.bf16.msra.mxu0 %v231
    %274 = vmatprep.subr.bf16.mxu0 0
    %275 = vmatpush1.bf16.msra.mxu0 %v232
    %276 = vmatprep.subr.bf16.mxu0 0
    %277 = vmatpush1.bf16.msra.mxu0 %v233
    %278 = vmatprep.subr.bf16.mxu0 0
    %279 = vmatpush1.bf16.msra.mxu0 %v234
    %280 = vmatprep.subr.bf16.mxu0 0
    %281 = vmatpush1.bf16.msra.mxu0 %v235
    %282 = vmatprep.subr.bf16.mxu0 0
    %283 = vmatpush1.bf16.msra.mxu0 %v236
    %284 = vmatprep.subr.bf16.mxu0 0
    %285 = vmatpush1.bf16.msra.mxu0 %v237
    %286 = vmatprep.mubr.bf16.mxu0 %v143
    %287 = vmatmul.mubr.bf16.gmra.mrb[0].mxu0 %v142
    %v288 = vpop.f32.mrb[0].mxu0
    %v289 = vadd.f32 %v116, %v288
    %v290 = vpop.f32.mrb[0].mxu0
    %v291 = vpop.f32.mrb[0].mxu0
    %v292 = vadd.f32 %v116, %v291
    %v293 = vpop.f32.mrb[0].mxu0
    %294 = vmatprep.mubr.bf16.mxu0 %v145
    %295 = vmatmul.mubr.bf16.gmra.mrb[0].mxu0 %v144
    %v296 = vpop.f32.mrb[0].mxu0
    %v297 = vadd.f32 %v116, %v296
    %v298 = vpop.f32.mrb[0].mxu0
    %v299 = vpop.f32.mrb[0].mxu0
    %v300 = vadd.f32 %v116, %v299
    %v301 = vpop.f32.mrb[0].mxu0
    %302 = vmatprep.mubr.bf16.mxu0 %v147
    %303 = vmatmul.mubr.bf16.gmra.mrb[0].mxu0 %v146
    %v304 = vpop.f32.mrb[0].mxu0
    %v305 = vadd.f32 %v116, %v304
    %v306 = vpop.f32.mrb[0].mxu0
    %v307 = vpop.f32.mrb[0].mxu0
    %v308 = vadd.f32 %v116, %v307
    %v309 = vpop.f32.mrb[0].mxu0
    %310 = vmatprep.mubr.bf16.mxu0 %v149
    %311 = vmatmul.mubr.bf16.gmra.mrb[0].mxu0 %v148
    %v312 = vpop.f32.mrb[0].mxu0
    %v313 = vadd.f32 %v116, %v312
    %v314 = vpop.f32.mrb[0].mxu0
    %v315 = vpop.f32.mrb[0].mxu0
    %v316 = vadd.f32 %v116, %v315
    %v317 = vpop.f32.mrb[0].mxu0
    %318 = vdwg.mxu0
    %v319 = vmul.f32 %v289, %v289
    %v320 = vmul.f32 %v292, %v292
    %v321 = vmul.f32 %v297, %v297
    %v322 = vmul.f32 %v300, %v300
    %v323 = vmul.f32 %v305, %v305
    %v324 = vmul.f32 %v308, %v308
    %v325 = vmul.f32 %v313, %v313
    %v326 = vmul.f32 %v316, %v316
    %v327 = vmul.f32 %v289, %v319
    %v328 = vmul.f32 %v292, %v320
    %v329 = vmul.f32 %v297, %v321
    %v330 = vmul.f32 %v300, %v322
    %v331 = vmul.f32 %v305, %v323
    %v332 = vmul.f32 %v308, %v324
    %v333 = vmul.f32 %v313, %v325
    %v334 = vmul.f32 %v316, %v326
    %v335 = vmul.f32 %v327, 0.044715
    %v336 = vmul.f32 %v328, 0.044715
    %v337 = vmul.f32 %v329, 0.044715
    %v338 = vmul.f32 %v330, 0.044715
    %v339 = vmul.f32 %v331, 0.044715
    %v340 = vmul.f32 %v332, 0.044715
    %v341 = vmul.f32 %v333, 0.044715
    %v342 = vmul.f32 %v334, 0.044715
    %v343 = vadd.f32 %v289, %v335
    %v344 = vadd.f32 %v292, %v336
    %v345 = vadd.f32 %v297, %v337
    %v346 = vadd.f32 %v300, %v338
    %v347 = vadd.f32 %v305, %v339
    %v348 = vadd.f32 %v308, %v340
    %v349 = vadd.f32 %v313, %v341
    %v350 = vadd.f32 %v316, %v342
    %v351 = vmul.f32 %v343, 0.7978846
    %v352 = vmul.f32 %v344, 0.7978846
    %v353 = vmul.f32 %v345, 0.7978846
    %v354 = vmul.f32 %v346, 0.7978846
    %v355 = vmul.f32 %v347, 0.7978846
    %v356 = vmul.f32 %v348, 0.7978846
    %v357 = vmul.f32 %v349, 0.7978846
    %v358 = vmul.f32 %v350, 0.7978846
    %v359 = vtanh.pop %v351
    %v360 = vtanh.pop %v352
    %v361 = vtanh.pop %v353
    %v362 = vtanh.pop %v354
    %v363 = vtanh.pop %v355
    %v364 = vtanh.pop %v356
    %v365 = vtanh.pop %v357
    %v366 = vtanh.pop %v358
    %v367 = vadd.f32 %v359, 1.0
    %v368 = vadd.f32 %v360, 1.0
    %v369 = vadd.f32 %v361, 1.0
    %v370 = vadd.f32 %v362, 1.0
    %v371 = vadd.f32 %v363, 1.0
    %v372 = vadd.f32 %v364, 1.0
    %v373 = vadd.f32 %v365, 1.0
    %v374 = vadd.f32 %v366, 1.0
    %v375 = vmul.f32 %v367, 0.5
    %v376 = vmul.f32 %v368, 0.5
    %v377 = vmul.f32 %v369, 0.5
    %v378 = vmul.f32 %v370, 0.5
    %v379 = vmul.f32 %v371, 0.5
    %v380 = vmul.f32 %v372, 0.5
    %v381 = vmul.f32 %v373, 0.5
    %v382 = vmul.f32 %v374, 0.5
    %v383 = vmul.f32 %v289, %v375
    %v384 = vmul.f32 %v292, %v376
    %v385 = vmul.f32 %v297, %v377
    %v386 = vmul.f32 %v300, %v378
    %v387 = vmul.f32 %v305, %v379
    %v388 = vmul.f32 %v308, %v380
    %v389 = vmul.f32 %v313, %v381
    %v390 = vmul.f32 %v316, %v382
    %v391 = vld [vmem:[#allocation2] sm:$0xff]
    %v392 = vld [vmem:[%s5] sm:$0xff]
    %vm393 = vcmask 523264
    %v395 = vsel %vm393, %v392, 0
    %397 = vmatprep.subr.mxu0 0.0
    %398 = vmatpush1.msra.mxu0 %v383
    %399 = vmatprep.subr.mxu0 0.0
    %400 = vmatpush1.msra.mxu0 %v384
    %401 = vmatprep.subr.mxu0 0.0
    %402 = vmatpush1.msra.mxu0 %v385
    %403 = vmatprep.subr.mxu0 0.0
    %404 = vmatpush1.msra.mxu0 %v386
    %405 = vmatprep.subr.mxu0 0.0
    %406 = vmatpush1.msra.mxu0 %v387
    %407 = vmatprep.subr.mxu0 0.0
    %408 = vmatpush1.msra.mxu0 %v388
    %409 = vmatprep.subr.mxu0 0.0
    %410 = vmatpush1.msra.mxu0 %v389
    %411 = vmatprep.subr.mxu0 0.0
    %412 = vmatpush1.msra.mxu0 %v390
    %413 = vmatprep.subr.mxu0 0.0
    %414 = vmatpush1.msra.mxu0 0.0
    %415 = vmatprep.subr.mxu0 0.0
    %416 = vmatpush1.msra.mxu0 0.0
    %417 = vmatprep.subr.mxu0 0.0
    %418 = vmatpush1.msra.mxu0 0.0
    %419 = vmatprep.subr.mxu0 0.0
    %420 = vmatpush1.msra.mxu0 0.0
    %421 = vmatprep.subr.mxu0 0.0
    %422 = vmatpush1.msra.mxu0 0.0
    %423 = vmatprep.subr.mxu0 0.0
    %424 = vmatpush1.msra.mxu0 0.0
    %425 = vmatprep.subr.mxu0 0.0
    %426 = vmatpush1.msra.mxu0 0.0
    %427 = vmatprep.subr.mxu0 0.0
    %428 = vmatpush1.msra.mxu0 0.0
    %429 = vmatprep.subr.mxu0 0.0
    %430 = vmatpush1.msra.mxu0 0.0
    %431 = vmatprep.subr.mxu0 0.0
    %432 = vmatpush1.msra.mxu0 0.0
    %433 = vmatprep.subr.mxu0 0.0
    %434 = vmatpush1.msra.mxu0 0.0
    %435 = vmatprep.subr.mxu0 0.0
    %436 = vmatpush1.msra.mxu0 0.0
    %437 = vmatprep.subr.mxu0 0.0
    %438 = vmatpush1.msra.mxu0 0.0
    %439 = vmatprep.subr.mxu0 0.0
    %440 = vmatpush1.msra.mxu0 0.0
    %441 = vmatprep.subr.mxu0 0.0
    %442 = vmatpush1.msra.mxu0 0.0
    %443 = vmatprep.subr.mxu0 0.0
    %444 = vmatpush1.msra.mxu0 0.0
    %445 = vmatprep.subr.mxu0 0.0
    %446 = vmatpush1.msra.mxu0 0.0
    %447 = vmatprep.subr.mxu0 0.0
    %448 = vmatpush1.msra.mxu0 0.0
    %449 = vmatprep.subr.mxu0 0.0
    %450 = vmatpush1.msra.mxu0 0.0
    %451 = vmatprep.subr.mxu0 0.0
    %452 = vmatpush1.msra.mxu0 0.0
    %453 = vmatprep.subr.mxu0 0.0
    %454 = vmatpush1.msra.mxu0 0.0
    %455 = vmatprep.subr.mxu0 0.0
    %456 = vmatpush1.msra.mxu0 0.0
    %457 = vmatprep.subr.mxu0 0.0
    %458 = vmatpush1.msra.mxu0 0.0
    %459 = vmatprep.subr.mxu0 0.0
    %460 = vmatpush1.msra.mxu0 0.0
    %461 = vmatprep.mubr.f32.mxu0 0.0
    %462 = vmatmul.mubr.f32.gmra.mrb[0].mxu0 %v395
    %v463 = vpop.f32.mrb[0].mxu0
    %v464 = vadd.f32 0.0, %v463
    %v465 = vpop.f32.mrb[0].mxu0
    %466 = vdwg.mxu0
    %v467 = vadd.f32 %v391, %v464
    %468 = vst [vmem:[#allocation2] sm:$0xff] %v467
    // Predicated region
    $region42: #{tpu_custom_call.1} parent=1 // pred_check
      %p469 = pneg %p66
    $region43: #{tpu_custom_call.1} parent=1 // pred_check_branch
      %471 = sbr.rel (%p469) target = $region45
    $region44: #{tpu_custom_call.1} parent=1 // pred_region
      %v472 = vld [vmem:[#allocation2] sm:$0xff]
      %v473 = vld [vmem:[%s2] sm:$0x1]
      %v474 = vmul.f32 %v473, %v473
      %v475 = vmul.f32 %v473, %v474
      %v476 = vmul.f32 %v475, 0.044715
      %v477 = vadd.f32 %v473, %v476
      %v478 = vmul.f32 %v477, 0.7978846
      %v479 = vtanh.pop %v478
      %v480 = vadd.f32 %v479, 1.0
      %v481 = vmul.f32 %v480, 0.5
      %v482 = vmul.f32 %v473, %v481
      %v483 = vmul.f32 %v482, 4.0
      %v485 = vlaneseq
      %v486 = vshrl.u32 %v485, 7
      %v487 = vsub.s32 0, %v486
      %v488 = vrot.slane %v483, %v487
      %v490 = vsub.f32 %v472, %v488
      %v491 = vmul.f32 %v490, 0.25
      %v492 = vpack.c.bf16 %v491, %v491
      %v493 = vld [vmem:[#allocation8] sm:$0xf]
      %v494 = vld [vmem:[#allocation8 + $0x4] sm:$0xf]
      %v495 = vld [vmem:[#allocation8 + $0x8] sm:$0xf]
      %v496 = vld [vmem:[#allocation8 + $0xc] sm:$0xf]
      %v497 = vld [vmem:[#allocation8 + $0x10] sm:$0xf]
      %v498 = vld [vmem:[#allocation8 + $0x14] sm:$0xf]
      %v499 = vld [vmem:[#allocation8 + $0x18] sm:$0xf]
      %v500 = vld [vmem:[#allocation8 + $0x1c] sm:$0xf]
      %v501 = vld [vmem:[#allocation8 + $0x20] sm:$0xf]
      %v502 = vld [vmem:[#allocation8 + $0x24] sm:$0xf]
      %v503 = vld [vmem:[#allocation8 + $0x28] sm:$0xf]
      %v504 = vld [vmem:[#allocation8 + $0x2c] sm:$0xf]
      %v505 = vld [vmem:[#allocation8 + $0x30] sm:$0xf]
      %v506 = vld [vmem:[#allocation8 + $0x34] sm:$0xf]
      %v507 = vld [vmem:[#allocation8 + $0x38] sm:$0xf]
      %v508 = vld [vmem:[#allocation8 + $0x3c] sm:$0xf]
      %v509 = vld [vmem:[%s4] sm:$0x1]
      %v511 = vlaneseq
      %v512 = vshrl.u32 %v511, 7
      %v513 = vsub.s32 0, %v512
      %v514 = vrot.slane %v509, %v513
      %v532 = vunpack.c.l.b16 %v493
      %v533 = vunpack.c.l.b16 %v494
      %v534 = vunpack.c.l.b16 %v495
      %v535 = vunpack.c.l.b16 %v496
      %v536 = vunpack.c.l.b16 %v497
      %v537 = vunpack.c.l.b16 %v498
      %v538 = vunpack.c.l.b16 %v499
      %v539 = vunpack.c.l.b16 %v500
      %v540 = vunpack.c.l.b16 %v501
      %v541 = vunpack.c.l.b16 %v502
      %v542 = vunpack.c.l.b16 %v503
      %v543 = vunpack.c.l.b16 %v504
      %v544 = vunpack.c.l.b16 %v505
      %v545 = vunpack.c.l.b16 %v506
      %v546 = vunpack.c.l.b16 %v507
      %v547 = vunpack.c.l.b16 %v508
      %v548 = vpack.c.b16 %v533, %v532
      %v549 = vpack.c.b16 %v535, %v534
      %v550 = vpack.c.b16 %v537, %v536
      %v551 = vpack.c.b16 %v539, %v538
      %v552 = vpack.c.b16 %v541, %v540
      %v553 = vpack.c.b16 %v543, %v542
      %v554 = vpack.c.b16 %v545, %v544
      %v555 = vpack.c.b16 %v547, %v546
      %564 = vmatprep.subr.bf16.mxu0 0
      %565 = vmatpush1.bf16.msra.mxu0 %v548
      %566 = vmatprep.subr.bf16.mxu0 0
      %567 = vmatpush1.bf16.msra.mxu0 %v549
      %568 = vmatprep.subr.bf16.mxu0 0
      %569 = vmatpush1.bf16.msra.mxu0 %v550
      %570 = vmatprep.subr.bf16.mxu0 0
      %571 = vmatpush1.bf16.msra.mxu0 %v551
      %572 = vmatprep.subr.bf16.mxu0 0
      %573 = vmatpush1.bf16.msra.mxu0 %v552
      %574 = vmatprep.subr.bf16.mxu0 0
      %575 = vmatpush1.bf16.msra.mxu0 %v553
      %576 = vmatprep.subr.bf16.mxu0 0
      %577 = vmatpush1.bf16.msra.mxu0 %v554
      %578 = vmatprep.subr.bf16.mxu0 0
      %579 = vmatpush1.bf16.msra.mxu0 %v555
      %580 = vmatprep.subr.bf16.mxu0 0
      %581 = vmatpush1.bf16.msra.mxu0 0
      %582 = vmatprep.subr.bf16.mxu0 0
      %583 = vmatpush1.bf16.msra.mxu0 0
      %584 = vmatprep.subr.bf16.mxu0 0
      %585 = vmatpush1.bf16.msra.mxu0 0
      %586 = vmatprep.subr.bf16.mxu0 0
      %587 = vmatpush1.bf16.msra.mxu0 0
      %588 = vmatprep.subr.bf16.mxu0 0
      %589 = vmatpush1.bf16.msra.mxu0 0
      %590 = vmatprep.subr.bf16.mxu0 0
      %591 = vmatpush1.bf16.msra.mxu0 0
      %592 = vmatprep.subr.bf16.mxu0 0
      %593 = vmatpush1.bf16.msra.mxu0 0
      %594 = vmatprep.subr.bf16.mxu0 0
      %595 = vmatpush1.bf16.msra.mxu0 0
      %596 = vmatprep.mubr.bf16.mxu0 0
      %597 = vmatmul.mubr.bf16.gmra.mrb[0].mxu0 %v492
      %v598 = vpop.f32.mrb[0].mxu0
      %v599 = vadd.f32 %v514, %v598
      %v600 = vpop.f32.mrb[0].mxu0
      %v601 = vpop.f32.mrb[0].mxu0
      %v602 = vpop.f32.mrb[0].mxu0
      %603 = vdwg.mxu0
      %604 = vst [vmem:[#allocation9] sm:$0xff] %v599
    $region45: #{tpu_custom_call.1} parent=1 // pred_fallthru
      _
    // Predicated region
    $region46: #{tpu_custom_call.1} parent=1 // pred_check
      _
    $region47: #{tpu_custom_call.1} parent=1 // pred_check_branch
      %606 = sbr.rel (0) target = $region49
    $region48: #{tpu_custom_call.1} parent=1 // pred_region
      %s608 = ssub.s32 128, 128
      %609 = vsyncadd [#allocation5], %s608
      %s611 = sshll.u32 [#allocation9], 4
      %s612 = int_to_ptr.vmem [resolvable:$true] %s611
      %614 = dma.vmem_to_hbm [thread:$0]  %s612, 128, %s6, [#allocation5]
    $region49: #{tpu_custom_call.1} parent=1 // pred_fallthru
      _
    // Predicated region
    $region50: #{tpu_custom_call.1} parent=1 // pred_check
      _
    $region51: #{tpu_custom_call.1} parent=1 // pred_check_branch
      %616 = sbr.rel (0) target = $region53
    $region52: #{tpu_custom_call.1} parent=1 // pred_region
      %617 = dma.done [#allocation5], 128
    $region53: #{tpu_custom_call.1} parent=1 // pred_fallthru
      _
    %618 = vsyncpa [#allocation4], 1
    %619 = vsyncpa [#allocation7], 1
    %620 = vsyncpa [#allocation5], 1

</llo_original>
